<compile_context>
chip_gen: v6e
topology: v6e:2x2x1
jax: 0.10.0
libtpu: 0.0.40
codegen_flags: <defaults>
</compile_context>

<pallas_src>
from functools import partial
import math

import jax
import jax.numpy as jnp
from jax.experimental import pallas as pl
from jax.experimental.pallas import tpu as pltpu


def _round_up(x, m):
    return ((x + m - 1) // m) * m


# ----------------------------- Pallas kernel ------------------------------ #
def _propagate_kernel(a_ref, e_ref, acc_in_ref, e_out_ref, acc_out_ref, s_ref):
    """One LightGCN propagation step for one row tile.

    E_new[i] = sum_k A[i, k] @ E[k]        (k = reduction grid axis)
    acc_out[i] = acc_in[i] + E_new[i]      (running sum over layers, f32)
    """
    k = pl.program_id(1)

    @pl.when(k == 0)
    def _():
        s_ref[...] = jnp.zeros_like(s_ref)

    s_ref[...] += jnp.dot(a_ref[...], e_ref[...],
                          preferred_element_type=jnp.float32)

    @pl.when(k == pl.num_programs(1) - 1)
    def _():
        e_out_ref[...] = s_ref[...].astype(e_out_ref.dtype)
        acc_out_ref[...] = acc_in_ref[...] + s_ref[...]


def lgcn_propagate(adj, emb, acc, *, tn=128, tk=128):
    """Fused, tiled:  E_new = adj @ emb ; acc_new = acc + E_new."""
    n, n2 = adj.shape
    d = emb.shape[1]
    assert n == n2 and n % tn == 0 and n % tk == 0
    assert emb.shape[0] == n and acc.shape == (n, d)

    return pl.pallas_call(
        _propagate_kernel,
        out_shape=(
            jax.ShapeDtypeStruct((n, d), emb.dtype),     # E_new
            jax.ShapeDtypeStruct((n, d), jnp.float32),   # running layer sum
        ),
        grid_spec=pltpu.PrefetchScalarGridSpec(
            num_scalar_prefetch=0,
            grid=(n // tn, n // tk),
            in_specs=[
                pl.BlockSpec((tn, tk), lambda i, k: (i, k)),  # adjacency tile
                pl.BlockSpec((tk, d), lambda i, k: (k, 0)),   # embedding K-slab
                pl.BlockSpec((tn, d), lambda i, k: (i, 0)),   # running sum (resident)
            ],
            out_specs=(
                pl.BlockSpec((tn, d), lambda i, k: (i, 0)),
                pl.BlockSpec((tn, d), lambda i, k: (i, 0)),
            ),
            scratch_shapes=[pltpu.VMEM((tn, d), jnp.float32)],
        ),
        input_output_aliases={2: 1},  # acc_in -> acc_out (accumulate in place)
        compiler_params=pltpu.CompilerParams(
            dimension_semantics=("parallel", "arbitrary")),
    )(adj, emb, acc)


# ------------------------------ LGCN encoder ------------------------------ #
@partial(jax.jit, static_argnames=("n_layers", "tile"))
def lgcn_encoder_forward(norm_adj, user_emb, item_emb, *, n_layers, tile=128):
    user_num, d = user_emb.shape
    item_num = item_emb.shape[0]
    n = user_num + item_num

    # ego_embeddings = cat([user_emb, item_emb], 0)
    ego = jnp.concatenate([user_emb, item_emb], axis=0)

    # Pad rows to the tile size and features to a lane-dense multiple of 128.
    n_pad = _round_up(n, tile)
    d_pad = _round_up(d, 128)
    ego_p = jnp.pad(ego, ((0, n_pad - n), (0, d_pad - d)))
    adj_p = jnp.pad(norm_adj, ((0, n_pad - n), (0, n_pad - n)))

    emb = ego_p
    acc = ego_p.astype(jnp.float32)  # layer-0 term of the mean
    for _ in range(n_layers):
        emb, acc = lgcn_propagate(adj_p, emb, acc, tn=tile, tk=tile)

    mean_emb = (acc * (1.0 / (n_layers + 1))).astype(user_emb.dtype)
    mean_emb = mean_emb[:n, :d]
    return mean_emb[:user_num], mean_emb[user_num:]


# ----------------------------- synthetic data ------------------------------ #
def xavier_uniform(key, shape, dtype=jnp.float32):
    fan_in, fan_out = shape[-2], shape[-1]
    bound = math.sqrt(6.0 / (fan_in + fan_out))
    return jax.random.uniform(key, shape, dtype, minval=-bound, maxval=bound)


def build_norm_adj(key, user_num, item_num, density=0.05):
    """Symmetrically-normalized dense user-item adjacency (data.ui_adj)."""
    # TODO(synk): the PyTorch module uses a sparse adjacency with
    # torch.sparse.mm; here it is densified (a true sparse SpMM would need a
    # scalar-prefetch / gather Pallas kernel).
    n = user_num + item_num
    r = (jax.random.uniform(key, (user_num, item_num)) < density
         ).astype(jnp.float32)
    adj = jnp.zeros((n, n), jnp.float32)
    adj = adj.at[:user_num, user_num:].set(r)
    adj = adj.at[user_num:, :user_num].set(r.T)
    deg = adj.sum(axis=1)
    d_inv_sqrt = jnp.where(deg > 0.0, 1.0 / jnp.sqrt(deg), 0.0)
    return adj * d_inv_sqrt[:, None] * d_inv_sqrt[None, :]


# --------------------------------- main ------------------------------------ #
if __name__ == "__main__":
    user_num, item_num = 200, 300     # N = 500 -> padded to 512 (4 row tiles)
    emb_size = 64                     # padded to 128 lanes inside the kernel
    n_layers = 3

    key = jax.random.PRNGKey(0)
    k_adj, k_u, k_i = jax.random.split(key, 3)
    norm_adj = build_norm_adj(k_adj, user_num, item_num)
    user_emb = xavier_uniform(k_u, (user_num, emb_size))
    item_emb = xavier_uniform(k_i, (item_num, emb_size))

    u_out, i_out = lgcn_encoder_forward(norm_adj, user_emb, item_emb,
                                        n_layers=n_layers, tile=128)
    jax.block_until_ready((u_out, i_out))

    # Plain-JAX reference of the LGCN forward.
    ego = jnp.concatenate([user_emb, item_emb], axis=0)
    all_e = [ego]
    e = ego
    for _ in range(n_layers):
        e = jnp.matmul(norm_adj, e, precision=jax.lax.Precision.HIGHEST)
        all_e.append(e)
    ref = jnp.mean(jnp.stack(all_e, axis=1), axis=1)

    assert u_out.shape == (user_num, emb_size)
    assert i_out.shape == (item_num, emb_size)
    assert jnp.allclose(u_out, ref[:user_num], atol=5e-3, rtol=5e-3)
    assert jnp.allclose(i_out, ref[user_num:], atol=5e-3, rtol=5e-3)

    print("KERNEL_OK")
</pallas_src>

<mosaic_0001>
module attributes {stable_mosaic.version = 11 : i64} {
  func.func @_propagate_kernel(%arg0: i32, %arg1: i32, %arg2: memref<128x128xf32, #tpu.memory_space<vmem>>, %arg3: memref<128x128xf32, #tpu.memory_space<vmem>>, %arg4: memref<128x128xf32, #tpu.memory_space<vmem>>, %arg5: memref<128x128xf32, #tpu.memory_space<vmem>>, %arg6: memref<128x128xf32, #tpu.memory_space<vmem>>, %arg7: memref<128x128xf32, #tpu.memory_space<vmem>>) attributes {dimension_semantics = [#tpu.dimension_semantics<parallel>, #tpu.dimension_semantics<arbitrary>], iteration_bounds = array<i64: 4, 4>, scalar_prefetch = 0 : i64, scratch_operands = 1 : i64, tpu.core_type = #tpu.core_type<tc>, window_params = [{transform_indices = @transform_0, window_bounds = array<i64: 128, 128>}, {transform_indices = @transform_1, window_bounds = array<i64: 128, 128>}, {transform_indices = @transform_2, window_bounds = array<i64: 128, 128>}, {transform_indices = @transform_3, window_bounds = array<i64: 128, 128>}, {transform_indices = @transform_4, window_bounds = array<i64: 128, 128>}]} {
    %c0_i32 = arith.constant 0 : i32
    %0 = arith.cmpi eq, %arg1, %c0_i32 : i32
    %1 = arith.extui %0 : i1 to i32
    %c0_i32_0 = arith.constant 0 : i32
    %2 = arith.cmpi ne, %1, %c0_i32_0 : i32
    scf.if %2 {
      %cst_9 = arith.constant 0.000000e+00 : f32
      %12 = vector.broadcast %cst_9 : f32 to vector<128x128xf32>
      %c0_10 = arith.constant 0 : index
      %c0_11 = arith.constant 0 : index
      %13 = vector.load %arg7[%c0_10, %c0_11] : memref<128x128xf32, #tpu.memory_space<vmem>>, vector<128x128xf32>
      tpu.vector_store %arg7[%c0_10, %c0_11], %12 {strides = array<i32>} : memref<128x128xf32, #tpu.memory_space<vmem>>, vector<128x128xf32>,
    } else {
    }
    %c0 = arith.constant 0 : index
    %c0_1 = arith.constant 0 : index
    %3 = vector.load %arg7[%c0, %c0_1] : memref<128x128xf32, #tpu.memory_space<vmem>>, vector<128x128xf32>
    %c0_2 = arith.constant 0 : index
    %c0_3 = arith.constant 0 : index
    %4 = vector.load %arg2[%c0_2, %c0_3] : memref<128x128xf32, #tpu.memory_space<vmem>>, vector<128x128xf32>
    %c0_4 = arith.constant 0 : index
    %c0_5 = arith.constant 0 : index
    %5 = vector.load %arg3[%c0_4, %c0_5] : memref<128x128xf32, #tpu.memory_space<vmem>>, vector<128x128xf32>
    %cst = arith.constant dense<0.000000e+00> : vector<128x128xf32>
    %6 = tpu.matmul %4, %5, %cst {dimension_numbers = #tpu.dot_dimension_numbers<[1], [0], [0], [1], [0, 0, 1, 1], [], []>} : vector<128x128xf32>, vector<128x128xf32>, vector<128x128xf32> -> vector<128x128xf32>
    %7 = arith.addf %3, %6 : vector<128x128xf32>
    %c0_6 = arith.constant 0 : index
    %c0_7 = arith.constant 0 : index
    %8 = vector.load %arg7[%c0_6, %c0_7] : memref<128x128xf32, #tpu.memory_space<vmem>>, vector<128x128xf32>
    tpu.vector_store %arg7[%c0_6, %c0_7], %7 {strides = array<i32>} : memref<128x128xf32, #tpu.memory_space<vmem>>, vector<128x128xf32>,
    %c3_i32 = arith.constant 3 : i32
    %9 = arith.cmpi eq, %arg1, %c3_i32 : i32
    %10 = arith.extui %9 : i1 to i32
    %c0_i32_8 = arith.constant 0 : i32
    %11 = arith.cmpi ne, %10, %c0_i32_8 : i32
    scf.if %11 {
      %c0_9 = arith.constant 0 : index
      %c0_10 = arith.constant 0 : index
      %12 = vector.load %arg7[%c0_9, %c0_10] : memref<128x128xf32, #tpu.memory_space<vmem>>, vector<128x128xf32>
      %c0_11 = arith.constant 0 : index
      %c0_12 = arith.constant 0 : index
      %13 = vector.load %arg5[%c0_11, %c0_12] : memref<128x128xf32, #tpu.memory_space<vmem>>, vector<128x128xf32>
      tpu.vector_store %arg5[%c0_11, %c0_12], %12 {strides = array<i32>} : memref<128x128xf32, #tpu.memory_space<vmem>>, vector<128x128xf32>,
      %c0_13 = arith.constant 0 : index
      %c0_14 = arith.constant 0 : index
      %14 = vector.load %arg4[%c0_13, %c0_14] : memref<128x128xf32, #tpu.memory_space<vmem>>, vector<128x128xf32>
      %c0_15 = arith.constant 0 : index
      %c0_16 = arith.constant 0 : index
      %15 = vector.load %arg7[%c0_15, %c0_16] : memref<128x128xf32, #tpu.memory_space<vmem>>, vector<128x128xf32>
      %16 = arith.addf %14, %15 : vector<128x128xf32>
      %c0_17 = arith.constant 0 : index
      %c0_18 = arith.constant 0 : index
      %17 = vector.load %arg6[%c0_17, %c0_18] : memref<128x128xf32, #tpu.memory_space<vmem>>, vector<128x128xf32>
      tpu.vector_store %arg6[%c0_17, %c0_18], %16 {strides = array<i32>} : memref<128x128xf32, #tpu.memory_space<vmem>>, vector<128x128xf32>,
    } else {
    }
    return
  }
  func.func @transform_0(%arg0: i32, %arg1: i32) -> (i32, i32) {
    %c0_i32 = arith.constant 0 : i32
    return %arg0, %arg1 : i32, i32
  }
  func.func @transform_1(%arg0: i32, %arg1: i32) -> (i32, i32) {
    %c0_i32 = arith.constant 0 : i32
    %c0_i32_0 = arith.constant 0 : i32
    return %arg1, %c0_i32 : i32, i32
  }
  func.func @transform_2(%arg0: i32, %arg1: i32) -> (i32, i32) {
    %c0_i32 = arith.constant 0 : i32
    %c0_i32_0 = arith.constant 0 : i32
    return %arg0, %c0_i32 : i32, i32
  }
  func.func @transform_3(%arg0: i32, %arg1: i32) -> (i32, i32) {
    %c0_i32 = arith.constant 0 : i32
    %c0_i32_0 = arith.constant 0 : i32
    return %arg0, %c0_i32 : i32, i32
  }
  func.func @transform_4(%arg0: i32, %arg1: i32) -> (i32, i32) {
    %c0_i32 = arith.constant 0 : i32
    %c0_i32_0 = arith.constant 0 : i32
    return %arg0, %c0_i32 : i32, i32
  }
}

module attributes {stable_mosaic.version = 11 : i64} {
  func.func @_propagate_kernel(%arg0: i32, %arg1: i32, %arg2: memref<128x128xf32, #tpu.memory_space<vmem>>, %arg3: memref<128x128xf32, #tpu.memory_space<vmem>>, %arg4: memref<128x128xf32, #tpu.memory_space<vmem>>, %arg5: memref<128x128xf32, #tpu.memory_space<vmem>>, %arg6: memref<128x128xf32, #tpu.memory_space<vmem>>, %arg7: memref<128x128xf32, #tpu.memory_space<vmem>>) attributes {dimension_semantics = [#tpu.dimension_semantics<parallel>, #tpu.dimension_semantics<arbitrary>], iteration_bounds = array<i64: 4, 4>, scalar_prefetch = 0 : i64, scratch_operands = 1 : i64, tpu.core_type = #tpu.core_type<tc>, window_params = [{transform_indices = @transform_0, window_bounds = array<i64: 128, 128>}, {transform_indices = @transform_1, window_bounds = array<i64: 128, 128>}, {transform_indices = @transform_2, window_bounds = array<i64: 128, 128>}, {transform_indices = @transform_3, window_bounds = array<i64: 128, 128>}, {transform_indices = @transform_4, window_bounds = array<i64: 128, 128>}]} {
    %c0_i32 = arith.constant 0 : i32
    %0 = arith.cmpi eq, %arg1, %c0_i32 : i32
    %1 = arith.extui %0 : i1 to i32
    %c0_i32_0 = arith.constant 0 : i32
    %2 = arith.cmpi ne, %1, %c0_i32_0 : i32
    scf.if %2 {
      %cst_9 = arith.constant 0.000000e+00 : f32
      %12 = vector.broadcast %cst_9 : f32 to vector<128x128xf32>
      %c0_10 = arith.constant 0 : index
      %c0_11 = arith.constant 0 : index
      %13 = vector.load %arg7[%c0_10, %c0_11] : memref<128x128xf32, #tpu.memory_space<vmem>>, vector<128x128xf32>
      tpu.vector_store %arg7[%c0_10, %c0_11], %12 {strides = array<i32>} : memref<128x128xf32, #tpu.memory_space<vmem>>, vector<128x128xf32>,
    } else {
    }
    %c0 = arith.constant 0 : index
    %c0_1 = arith.constant 0 : index
    %3 = vector.load %arg7[%c0, %c0_1] : memref<128x128xf32, #tpu.memory_space<vmem>>, vector<128x128xf32>
    %c0_2 = arith.constant 0 : index
    %c0_3 = arith.constant 0 : index
    %4 = vector.load %arg2[%c0_2, %c0_3] : memref<128x128xf32, #tpu.memory_space<vmem>>, vector<128x128xf32>
    %c0_4 = arith.constant 0 : index
    %c0_5 = arith.constant 0 : index
    %5 = vector.load %arg3[%c0_4, %c0_5] : memref<128x128xf32, #tpu.memory_space<vmem>>, vector<128x128xf32>
    %cst = arith.constant dense<0.000000e+00> : vector<128x128xf32>
    %6 = tpu.matmul %4, %5, %cst {dimension_numbers = #tpu.dot_dimension_numbers<[1], [0], [0], [1], [0, 0, 1, 1], [], []>} : vector<128x128xf32>, vector<128x128xf32>, vector<128x128xf32> -> vector<128x128xf32>
    %7 = arith.addf %3, %6 : vector<128x128xf32>
    %c0_6 = arith.constant 0 : index
    %c0_7 = arith.constant 0 : index
    %8 = vector.load %arg7[%c0_6, %c0_7] : memref<128x128xf32, #tpu.memory_space<vmem>>, vector<128x128xf32>
    tpu.vector_store %arg7[%c0_6, %c0_7], %7 {strides = array<i32>} : memref<128x128xf32, #tpu.memory_space<vmem>>, vector<128x128xf32>,
    %c3_i32 = arith.constant 3 : i32
    %9 = arith.cmpi eq, %arg1, %c3_i32 : i32
    %10 = arith.extui %9 : i1 to i32
    %c0_i32_8 = arith.constant 0 : i32
    %11 = arith.cmpi ne, %10, %c0_i32_8 : i32
    scf.if %11 {
      %c0_9 = arith.constant 0 : index
      %c0_10 = arith.constant 0 : index
      %12 = vector.load %arg7[%c0_9, %c0_10] : memref<128x128xf32, #tpu.memory_space<vmem>>, vector<128x128xf32>
      %c0_11 = arith.constant 0 : index
      %c0_12 = arith.constant 0 : index
      %13 = vector.load %arg5[%c0_11, %c0_12] : memref<128x128xf32, #tpu.memory_space<vmem>>, vector<128x128xf32>
      tpu.vector_store %arg5[%c0_11, %c0_12], %12 {strides = array<i32>} : memref<128x128xf32, #tpu.memory_space<vmem>>, vector<128x128xf32>,
      %c0_13 = arith.constant 0 : index
      %c0_14 = arith.constant 0 : index
      %14 = vector.load %arg4[%c0_13, %c0_14] : memref<128x128xf32, #tpu.memory_space<vmem>>, vector<128x128xf32>
      %c0_15 = arith.constant 0 : index
      %c0_16 = arith.constant 0 : index
      %15 = vector.load %arg7[%c0_15, %c0_16] : memref<128x128xf32, #tpu.memory_space<vmem>>, vector<128x128xf32>
      %16 = arith.addf %14, %15 : vector<128x128xf32>
      %c0_17 = arith.constant 0 : index
      %c0_18 = arith.constant 0 : index
      %17 = vector.load %arg6[%c0_17, %c0_18] : memref<128x128xf32, #tpu.memory_space<vmem>>, vector<128x128xf32>
      tpu.vector_store %arg6[%c0_17, %c0_18], %16 {strides = array<i32>} : memref<128x128xf32, #tpu.memory_space<vmem>>, vector<128x128xf32>,
    } else {
    }
    return
  }
  func.func @transform_0(%arg0: i32, %arg1: i32) -> (i32, i32) {
    %c0_i32 = arith.constant 0 : i32
    return %arg0, %arg1 : i32, i32
  }
  func.func @transform_1(%arg0: i32, %arg1: i32) -> (i32, i32) {
    %c0_i32 = arith.constant 0 : i32
    %c0_i32_0 = arith.constant 0 : i32
    return %arg1, %c0_i32 : i32, i32
  }
  func.func @transform_2(%arg0: i32, %arg1: i32) -> (i32, i32) {
    %c0_i32 = arith.constant 0 : i32
    %c0_i32_0 = arith.constant 0 : i32
    return %arg0, %c0_i32 : i32, i32
  }
  func.func @transform_3(%arg0: i32, %arg1: i32) -> (i32, i32) {
    %c0_i32 = arith.constant 0 : i32
    %c0_i32_0 = arith.constant 0 : i32
    return %arg0, %c0_i32 : i32, i32
  }
  func.func @transform_4(%arg0: i32, %arg1: i32) -> (i32, i32) {
    %c0_i32 = arith.constant 0 : i32
    %c0_i32_0 = arith.constant 0 : i32
    return %arg0, %c0_i32 : i32, i32
  }
}

</mosaic_0001>

<llo_original>
// kernel: lgcn_encoder_forward.3
$region0: #{lgcn_encoder_forward.3}
  #allocation0 [shape = 'u32[]', space=smem, size = 0x4, offset = 0x4, fixed_abs, tag = 'smem constant byte address 0x4 - core index']
  #allocation1 [shape = 'u32[144,128]{1,0:T(1,128)}', space=vmem, size = 0x12000, scoped, tag = 'internal scratch']
  #allocation2 [shape = 'f32[128,128]{1,0:T(8,128)}', space=vmem, size = 0x10000, scoped, tag = 'scratch operand']
  %s0 = inlined_call_operand.vmem [shape: f32[512,512], index: 0, kind: input, shape index: {}]
  %s1 = inlined_call_operand.vmem [shape: f32[512,128], index: 1, kind: input, shape index: {}]
  %s2 = inlined_call_operand.vmem [shape: f32[512,128], index: 2, kind: input, shape index: {}, may-alias: {2,4}]
  %s3 = inlined_call_operand.vmem [shape: f32[512,128], index: 3, kind: output, shape index: {0}]
  %s4 = inlined_call_operand.vmem [shape: f32[512,128], index: 4, kind: output, shape index: {1}, may-alias: {2,4}]
  %5 = xla_tuple %s3, %s4
  %s6 = sld [smem:[#allocation0]]
  $region99: #{lgcn_encoder_forward.3} parent=0
    _
  %s8 = ssub.s32 1, %s6
  %s9 = scalar_select 0, %s8, %s6
  $region1: #{lgcn_encoder_forward.3} parent=0
    #allocation3 [shape = 'u8[131072]{0}', space=vmem, size = 0x20000, scoped, tag = 'input window, operand 0']
    loop: start=0, step=1, limit=18
    $region2: #{lgcn_encoder_forward.3} parent=1 // loop_pre_header
      _
    $region3: #{lgcn_encoder_forward.3} parent=1 // loop_header
      %s11 = sphi 0, %s15
      %p12 = scmp.ge.s32.totalorder %s11, 18
      %s18 = sphi 0, %s30
      %s19 = sphi 0, %s26
      %s20 = sphi 0, %s18
      %s21 = sphi 0, %s19
      %s22 = sphi 0, %s20
      %s23 = sphi 0, %s21
      %s35 = sphi 0, %s37
      %s38 = sphi 0, %s35
      %s39 = sphi 0, %s38
      %s55 = sphi 0, %s39
      %s61 = sphi 0, %s63
      %s64 = sphi 0, %s61
      %s65 = sphi 0, %s64
      %s81 = sphi 0, %s65
      %s87 = sphi 0, %s89
      %s90 = sphi 0, %s87
      %s91 = sphi 0, %s90
      %s107 = sphi 0, %s91
      %s113 = sphi 0, %s115
      %s116 = sphi 0, %s113
      %s117 = sphi 0, %s116
      %s133 = sphi 0, %s117
      %s139 = sphi 0, %s141
      %s142 = sphi 0, %s139
      %s143 = sphi 0, %s142
      %s159 = sphi 0, %s143
    $region4: #{lgcn_encoder_forward.3} parent=1 // loop_header_branch
      %14 = sbr.rel (%p12) target = $region8
    $region5: #{lgcn_encoder_forward.3} parent=1 // loop_body
      %s16 = ssub.s32 %s11, 1
      %s17 = ssub.s32 %s11, 2
      %s24 = sadd.s32 1, %s19
      %p25 = scmp.ge.s32.totalorder %s24, 4
      %s26 = scalar_select %p25, 0, %s24
      %s27 = sadd.s32 1, %s18
      %s28 = scalar_select %p25, %s27, %s18
      %p29 = scmp.ge.s32.totalorder %s28, 4
      %s30 = scalar_select %p29, 0, %s28
      %s31 = ssub.s32 %s18, %s30
      %s32 = ssub.s32 %s19, %s26
      %s33 = sor.u32 %s31, %s32
      %p34 = scmp.eq.s32.totalorder %s33, 0
      %s36 = sadd.s32 %s35, 1
      %s37 = scalar_select %p34, %s35, %s36
      %p40 = pneg %p34
      %p41 = scmp.eq.s32.totalorder %s11, 15
      %p42 = por %p40, %p41
      %p43 = scmp.ne.s32.totalorder %s35, %s38
      %p44 = scmp.eq.s32.totalorder %s11, 0
      %p45 = por %p43, %p44
      %p46 = scmp.ne.s32.totalorder %s35, %s38
      %p47 = scmp.eq.s32.totalorder %s16, 15
      %p48 = por %p46, %p47
      %p49 = scmp.ne.s32.totalorder %s38, %s39
      %p50 = scmp.eq.s32.totalorder %s16, 0
      %p51 = por %p49, %p50
      %p52 = scmp.ne.s32.totalorder %s38, %s39
      %p53 = scmp.eq.s32.totalorder %s17, 15
      %p54 = por %p52, %p53
      %p56 = scmp.ne.s32.totalorder %s39, %s55
      %p57 = scmp.eq.s32.totalorder %s17, 0
      %p58 = por %p56, %p57
      %s59 = ssub.s32 %s19, %s26
      %p60 = scmp.eq.s32.totalorder %s59, 0
      %s62 = sadd.s32 %s61, 1
      %s63 = scalar_select %p60, %s61, %s62
      %p66 = pneg %p60
      %p67 = scmp.eq.s32.totalorder %s11, 15
      %p68 = por %p66, %p67
      %p69 = scmp.ne.s32.totalorder %s61, %s64
      %p70 = scmp.eq.s32.totalorder %s11, 0
      %p71 = por %p69, %p70
      %p72 = scmp.ne.s32.totalorder %s61, %s64
      %p73 = scmp.eq.s32.totalorder %s16, 15
      %p74 = por %p72, %p73
      %p75 = scmp.ne.s32.totalorder %s64, %s65
      %p76 = scmp.eq.s32.totalorder %s16, 0
      %p77 = por %p75, %p76
      %p78 = scmp.ne.s32.totalorder %s64, %s65
      %p79 = scmp.eq.s32.totalorder %s17, 15
      %p80 = por %p78, %p79
      %p82 = scmp.ne.s32.totalorder %s65, %s81
      %p83 = scmp.eq.s32.totalorder %s17, 0
      %p84 = por %p82, %p83
      %s85 = ssub.s32 %s18, %s30
      %p86 = scmp.eq.s32.totalorder %s85, 0
      %s88 = sadd.s32 %s87, 1
      %s89 = scalar_select %p86, %s87, %s88
      %p92 = pneg %p86
      %p93 = scmp.eq.s32.totalorder %s11, 15
      %p94 = por %p92, %p93
      %p95 = scmp.ne.s32.totalorder %s87, %s90
      %p96 = scmp.eq.s32.totalorder %s11, 0
      %p97 = por %p95, %p96
      %p98 = scmp.ne.s32.totalorder %s87, %s90
      %p99 = scmp.eq.s32.totalorder %s16, 15
      %p100 = por %p98, %p99
      %p101 = scmp.ne.s32.totalorder %s90, %s91
      %p102 = scmp.eq.s32.totalorder %s16, 0
      %p103 = por %p101, %p102
      %p104 = scmp.ne.s32.totalorder %s90, %s91
      %p105 = scmp.eq.s32.totalorder %s17, 15
      %p106 = por %p104, %p105
      %p108 = scmp.ne.s32.totalorder %s91, %s107
      %p109 = scmp.eq.s32.totalorder %s17, 0
      %p110 = por %p108, %p109
      %s111 = ssub.s32 %s18, %s30
      %p112 = scmp.eq.s32.totalorder %s111, 0
      %s114 = sadd.s32 %s113, 1
      %s115 = scalar_select %p112, %s113, %s114
      %p118 = pneg %p112
      %p119 = scmp.eq.s32.totalorder %s11, 15
      %p120 = por %p118, %p119
      %p121 = scmp.ne.s32.totalorder %s113, %s116
      %p122 = scmp.eq.s32.totalorder %s11, 0
      %p123 = por %p121, %p122
      %p124 = scmp.ne.s32.totalorder %s113, %s116
      %p125 = scmp.eq.s32.totalorder %s16, 15
      %p126 = por %p124, %p125
      %p127 = scmp.ne.s32.totalorder %s116, %s117
      %p128 = scmp.eq.s32.totalorder %s16, 0
      %p129 = por %p127, %p128
      %p130 = scmp.ne.s32.totalorder %s116, %s117
      %p131 = scmp.eq.s32.totalorder %s17, 15
      %p132 = por %p130, %p131
      %p134 = scmp.ne.s32.totalorder %s117, %s133
      %p135 = scmp.eq.s32.totalorder %s17, 0
      %p136 = por %p134, %p135
      %s137 = ssub.s32 %s18, %s30
      %p138 = scmp.eq.s32.totalorder %s137, 0
      %s140 = sadd.s32 %s139, 1
      %s141 = scalar_select %p138, %s139, %s140
      %p144 = pneg %p138
      %p145 = scmp.eq.s32.totalorder %s11, 15
      %p146 = por %p144, %p145
      %p147 = scmp.ne.s32.totalorder %s139, %s142
      %p148 = scmp.eq.s32.totalorder %s11, 0
      %p149 = por %p147, %p148
      %p150 = scmp.ne.s32.totalorder %s139, %s142
      %p151 = scmp.eq.s32.totalorder %s16, 15
      %p152 = por %p150, %p151
      %p153 = scmp.ne.s32.totalorder %s142, %s143
      %p154 = scmp.eq.s32.totalorder %s16, 0
      %p155 = por %p153, %p154
      %p156 = scmp.ne.s32.totalorder %s142, %s143
      %p157 = scmp.eq.s32.totalorder %s17, 15
      %p158 = por %p156, %p157
      %p160 = scmp.ne.s32.totalorder %s143, %s159
      %p161 = scmp.eq.s32.totalorder %s17, 0
      %p162 = por %p160, %p161
      %p163 = scmp.le.s32.totalorder 1, %s11
      %p164 = scmp.lt.s32.totalorder %s11, 17
      %p165 = pnand %p163, %p164
      %p166 = pneg %p165
      // Predicated region
      $region9: #{lgcn_encoder_forward.3} parent=5 // pred_check
        _
      $region10: #{lgcn_encoder_forward.3} parent=5 // pred_check_branch
        %168 = sbr.rel (%p165) target = $region12
      $region11: #{lgcn_encoder_forward.3} parent=5 // pred_region
        %s169 = ssub.s32 %s11, 1
      $region12: #{lgcn_encoder_forward.3} parent=5 // pred_fallthru
        _
      %p170 = scmp.lt.s32.totalorder %s11, 16
      // Predicated region
      $region13: #{lgcn_encoder_forward.3} parent=5 // pred_check
        %p171 = pneg %p170
      $region14: #{lgcn_encoder_forward.3} parent=5 // pred_check_branch
        %173 = sbr.rel (%p171) target = $region16
      $region15: #{lgcn_encoder_forward.3} parent=5 // pred_region
        // Predicated region
        $region17: #{lgcn_encoder_forward.3} parent=15 // pred_check
          %p174 = pneg %p45
        $region18: #{lgcn_encoder_forward.3} parent=15 // pred_check_branch
          %176 = sbr.rel (%p174) target = $region20
        $region19: #{lgcn_encoder_forward.3} parent=15 // pred_region
          %s177 = sand.u32 %s35, 1
          %s178 = sand.u32 %s35, 1
          %s179 = smul.addr %s178, 128
          %s180 = scalar_lea.vmem [#allocation3], %s179
          %s181 = smul.u32 16, %s18
          %s182 = smul.addr %s181, 4
          %s183 = sadd.s32 %s19, %s182
          %s184 = smul.addr %s183, 8
          %s185 = scalar_lea.vmem %s0, %s184
          // Predicated region
          $region21: #{lgcn_encoder_forward.3} parent=19 // pred_check
            _
          $region22: #{lgcn_encoder_forward.3} parent=19 // pred_check_branch
            %187 = sbr.rel (0) target = $region24
          $region23: #{lgcn_encoder_forward.3} parent=19 // pred_region
            // Predicated region
            $region25: #{lgcn_encoder_forward.3} parent=23 // pred_check
              _
            $region26: #{lgcn_encoder_forward.3} parent=23 // pred_check_branch
              %189 = sbr.rel (0) target = $region28
            $region27: #{lgcn_encoder_forward.3} parent=23 // pred_region
              // Predicated region
              $region40: #{lgcn_encoder_forward.3} parent=27 // pred_check
                _
              $region41: #{lgcn_encoder_forward.3} parent=27 // pred_check_branch
                %235 = sbr.rel (0) target = $region43
              $region42: #{lgcn_encoder_forward.3} parent=27 // pred_region
                loop: start=0, step=1, limit=1
                $region44: #{lgcn_encoder_forward.3} parent=42 // loop_pre_header
                  _
                $region45: #{lgcn_encoder_forward.3} parent=42 // loop_header
                  %s237 = sphi 0, %s241
                  %p238 = scmp.ge.s32.totalorder %s237, 1
                  %s242 = sphi %s185, %s185
                  %s243 = sphi %s180, %s180
                $region46: #{lgcn_encoder_forward.3} parent=42 // loop_header_branch
                  %240 = sbr.rel (%p238) target = $region50
                $region47: #{lgcn_encoder_forward.3} parent=42 // loop_body
                  %v244 = vld [vmem:[%s242] sm:$0xff]
                  %245 = vst [vmem:[%s243] sm:$0xff] %v244
                  %v246 = vld [vmem:[%s242 + $0x20] sm:$0xff]
                  %247 = vst [vmem:[%s243 + $0x8] sm:$0xff] %v246
                  %v248 = vld [vmem:[%s242 + $0x40] sm:$0xff]
                  %249 = vst [vmem:[%s243 + $0x10] sm:$0xff] %v248
                  %v250 = vld [vmem:[%s242 + $0x60] sm:$0xff]
                  %251 = vst [vmem:[%s243 + $0x18] sm:$0xff] %v250
                  %v252 = vld [vmem:[%s242 + $0x80] sm:$0xff]
                  %253 = vst [vmem:[%s243 + $0x20] sm:$0xff] %v252
                  %v254 = vld [vmem:[%s242 + $0xa0] sm:$0xff]
                  %255 = vst [vmem:[%s243 + $0x28] sm:$0xff] %v254
                  %v256 = vld [vmem:[%s242 + $0xc0] sm:$0xff]
                  %257 = vst [vmem:[%s243 + $0x30] sm:$0xff] %v256
                  %v258 = vld [vmem:[%s242 + $0xe0] sm:$0xff]
                  %259 = vst [vmem:[%s243 + $0x38] sm:$0xff] %v258
                  %v260 = vld [vmem:[%s242 + $0x100] sm:$0xff]
                  %261 = vst [vmem:[%s243 + $0x40] sm:$0xff] %v260
                  %v262 = vld [vmem:[%s242 + $0x120] sm:$0xff]
                  %263 = vst [vmem:[%s243 + $0x48] sm:$0xff] %v262
                  %v264 = vld [vmem:[%s242 + $0x140] sm:$0xff]
                  %265 = vst [vmem:[%s243 + $0x50] sm:$0xff] %v264
                  %v266 = vld [vmem:[%s242 + $0x160] sm:$0xff]
                  %267 = vst [vmem:[%s243 + $0x58] sm:$0xff] %v266
                  %v268 = vld [vmem:[%s242 + $0x180] sm:$0xff]
                  %269 = vst [vmem:[%s243 + $0x60] sm:$0xff] %v268
                  %v270 = vld [vmem:[%s242 + $0x1a0] sm:$0xff]
                  %271 = vst [vmem:[%s243 + $0x68] sm:$0xff] %v270
                  %v272 = vld [vmem:[%s242 + $0x1c0] sm:$0xff]
                  %273 = vst [vmem:[%s243 + $0x70] sm:$0xff] %v272
                  %v274 = vld [vmem:[%s242 + $0x1e0] sm:$0xff]
                  %275 = vst [vmem:[%s243 + $0x78] sm:$0xff] %v274
                $region48: #{lgcn_encoder_forward.3} parent=42 // loop_footer
                  %s241 = sadd.s32 1, %s237
                $region49: #{lgcn_encoder_forward.3} parent=42 // loop_footer_branch
                  %236 = sbr.rel target = $region45
                $region50: #{lgcn_encoder_forward.3} parent=42 // loop_exit
                  _
              $region43: #{lgcn_encoder_forward.3} parent=27 // pred_fallthru
                _
              // Predicated region
              $region51: #{lgcn_encoder_forward.3} parent=27 // pred_check
                _
              $region52: #{lgcn_encoder_forward.3} parent=27 // pred_check_branch
                %277 = sbr.rel target = $region54
              $region53: #{lgcn_encoder_forward.3} parent=27 // pred_region
                _
              $region54: #{lgcn_encoder_forward.3} parent=27 // pred_fallthru
                _
            $region28: #{lgcn_encoder_forward.3} parent=23 // pred_fallthru
              _
            // Predicated region
            $region29: #{lgcn_encoder_forward.3} parent=23 // pred_check
              _
            $region30: #{lgcn_encoder_forward.3} parent=23 // pred_check_branch
              %191 = sbr.rel target = $region32
            $region31: #{lgcn_encoder_forward.3} parent=23 // pred_region
              %s193 = ssub.s32 256, 1
              loop: start=0, step=1, limit=1
              $region33: #{lgcn_encoder_forward.3} parent=31 // loop_pre_header
                _
              $region34: #{lgcn_encoder_forward.3} parent=31 // loop_header
                %s195 = sphi 0, %s199
                %p196 = scmp.ge.s32.totalorder %s195, 1
                %s200 = sphi %s185, %s185
                %s201 = sphi %s180, %s180
              $region35: #{lgcn_encoder_forward.3} parent=31 // loop_header_branch
                %198 = sbr.rel (%p196) target = $region39
              $region36: #{lgcn_encoder_forward.3} parent=31 // loop_body
                %v202 = vld [vmem:[%s200] sm:%s193]
                %203 = vst [vmem:[%s201] sm:%s193] %v202
                %v204 = vld [vmem:[%s200 + $0x20] sm:%s193]
                %205 = vst [vmem:[%s201 + $0x8] sm:%s193] %v204
                %v206 = vld [vmem:[%s200 + $0x40] sm:%s193]
                %207 = vst [vmem:[%s201 + $0x10] sm:%s193] %v206
                %v208 = vld [vmem:[%s200 + $0x60] sm:%s193]
                %209 = vst [vmem:[%s201 + $0x18] sm:%s193] %v208
                %v210 = vld [vmem:[%s200 + $0x80] sm:%s193]
                %211 = vst [vmem:[%s201 + $0x20] sm:%s193] %v210
                %v212 = vld [vmem:[%s200 + $0xa0] sm:%s193]
                %213 = vst [vmem:[%s201 + $0x28] sm:%s193] %v212
                %v214 = vld [vmem:[%s200 + $0xc0] sm:%s193]
                %215 = vst [vmem:[%s201 + $0x30] sm:%s193] %v214
                %v216 = vld [vmem:[%s200 + $0xe0] sm:%s193]
                %217 = vst [vmem:[%s201 + $0x38] sm:%s193] %v216
                %v218 = vld [vmem:[%s200 + $0x100] sm:%s193]
                %219 = vst [vmem:[%s201 + $0x40] sm:%s193] %v218
                %v220 = vld [vmem:[%s200 + $0x120] sm:%s193]
                %221 = vst [vmem:[%s201 + $0x48] sm:%s193] %v220
                %v222 = vld [vmem:[%s200 + $0x140] sm:%s193]
                %223 = vst [vmem:[%s201 + $0x50] sm:%s193] %v222
                %v224 = vld [vmem:[%s200 + $0x160] sm:%s193]
                %225 = vst [vmem:[%s201 + $0x58] sm:%s193] %v224
                %v226 = vld [vmem:[%s200 + $0x180] sm:%s193]
                %227 = vst [vmem:[%s201 + $0x60] sm:%s193] %v226
                %v228 = vld [vmem:[%s200 + $0x1a0] sm:%s193]
                %229 = vst [vmem:[%s201 + $0x68] sm:%s193] %v228
                %v230 = vld [vmem:[%s200 + $0x1c0] sm:%s193]
                %231 = vst [vmem:[%s201 + $0x70] sm:%s193] %v230
                %v232 = vld [vmem:[%s200 + $0x1e0] sm:%s193]
                %233 = vst [vmem:[%s201 + $0x78] sm:%s193] %v232
              $region37: #{lgcn_encoder_forward.3} parent=31 // loop_footer
                %s199 = sadd.s32 1, %s195
              $region38: #{lgcn_encoder_forward.3} parent=31 // loop_footer_branch
                %194 = sbr.rel target = $region34
              $region39: #{lgcn_encoder_forward.3} parent=31 // loop_exit
                _
            $region32: #{lgcn_encoder_forward.3} parent=23 // pred_fallthru
              _
          $region24: #{lgcn_encoder_forward.3} parent=19 // pred_fallthru
            _
          %278 = vnop
        $region20: #{lgcn_encoder_forward.3} parent=15 // pred_fallthru
          _
        // Predicated region
        $region55: #{lgcn_encoder_forward.3} parent=15 // pred_check
          %p279 = pneg %p71
        $region56: #{lgcn_encoder_forward.3} parent=15 // pred_check_branch
          %281 = sbr.rel (%p279) target = $region58
        $region57: #{lgcn_encoder_forward.3} parent=15 // pred_region
          %s282 = smul.u32 16, %s19
          %p283 = scmp.lt.s32.totalorder %s282, 63
          %s284 = scalar_select %p283, %s282, 63
          %s285 = smul.addr %s284, 8
          %s286 = scalar_lea.vmem %s1, %s285
          %s287 = smul.u32 16, %s19
        $region58: #{lgcn_encoder_forward.3} parent=15 // pred_fallthru
          _
        // Predicated region
        $region59: #{lgcn_encoder_forward.3} parent=15 // pred_check
          %p288 = pneg %p97
        $region60: #{lgcn_encoder_forward.3} parent=15 // pred_check_branch
          %290 = sbr.rel (%p288) target = $region62
        $region61: #{lgcn_encoder_forward.3} parent=15 // pred_region
          %s291 = smul.u32 16, %s18
          %p292 = scmp.lt.s32.totalorder %s291, 63
          %s293 = scalar_select %p292, %s291, 63
          %s294 = smul.addr %s293, 8
          %s295 = scalar_lea.vmem %s2, %s294
          %s296 = smul.u32 16, %s18
        $region62: #{lgcn_encoder_forward.3} parent=15 // pred_fallthru
          _
      $region16: #{lgcn_encoder_forward.3} parent=5 // pred_fallthru
        _
      %p297 = scmp.le.s32.totalorder 1, %s11
      %p298 = scmp.lt.s32.totalorder %s11, 17
      %p299 = pnand %p297, %p298
      %p300 = pneg %p299
      // Predicated region
      $region63: #{lgcn_encoder_forward.3} parent=5 // pred_check
        _
      $region64: #{lgcn_encoder_forward.3} parent=5 // pred_check_branch
        %302 = sbr.rel (%p299) target = $region66
      $region65: #{lgcn_encoder_forward.3} parent=5 // pred_region
        %s303 = ssub.s32 %s11, 1
        %s304 = sand.u32 %s38, 1
        %s305 = sand.u32 %s38, 1
        %s306 = smul.addr %s305, 128
        %s307 = scalar_lea.vmem [#allocation3], %s306
        // Predicated region
        $region67: #{lgcn_encoder_forward.3} parent=65 // pred_check
          %p308 = pneg %p51
        $region68: #{lgcn_encoder_forward.3} parent=65 // pred_check_branch
          %310 = sbr.rel (%p308) target = $region70
        $region69: #{lgcn_encoder_forward.3} parent=65 // pred_region
          _
        $region70: #{lgcn_encoder_forward.3} parent=65 // pred_fallthru
          _
        %s311 = sand.u32 %s38, 1
        %s312 = sand.u32 %s38, 1
        %s313 = smul.addr %s312, 128
        %s314 = scalar_lea.vmem [#allocation3], %s313
        %p315 = pneg %p51
        %p316 = pneg %p48
        %s317 = smul.u32 16, %s21
        %p318 = scmp.lt.s32.totalorder %s317, 63
        %s319 = scalar_select %p318, %s317, 63
        %s320 = smul.addr %s319, 8
        %s321 = scalar_lea.vmem %s1, %s320
        %p322 = pneg %p77
        %p323 = pneg %p74
        %s324 = smul.u32 16, %s20
        %p325 = scmp.lt.s32.totalorder %s324, 63
        %s326 = scalar_select %p325, %s324, 63
        %s327 = smul.addr %s326, 8
        %s328 = scalar_lea.vmem %s2, %s327
        %p329 = pneg %p103
        %p330 = pneg %p100
        %p331 = pneg %p129
        %p332 = pneg %p126
        %s333 = smul.u32 16, %s20
        %p334 = scmp.lt.s32.totalorder %s333, 63
        %s335 = scalar_select %p334, %s333, 63
        %s336 = smul.addr %s335, 8
        %s337 = scalar_lea.vmem %s3, %s336
        %p338 = pneg %p155
        %p339 = pneg %p152
        %s340 = smul.u32 16, %s20
        %p341 = scmp.lt.s32.totalorder %s340, 63
        %s342 = scalar_select %p341, %s340, 63
        %s343 = smul.addr %s342, 8
        %s344 = scalar_lea.vmem %s4, %s343
        %s345 = smul.u32 16, %s20
        %s346 = smul.u32 16, %s21
        %p347 = scmp.lt.s32.totalorder %s346, 63
        %s348 = scalar_select %p347, %s346, 63
        %s349 = smul.addr %s348, 8
        %s350 = scalar_lea.vmem %s1, %s349
        %s351 = smul.u32 16, %s21
        %s352 = smul.u32 16, %s20
        %p353 = scmp.lt.s32.totalorder %s352, 63
        %s354 = scalar_select %p353, %s352, 63
        %s355 = smul.addr %s354, 8
        %s356 = scalar_lea.vmem %s2, %s355
        %s357 = smul.u32 16, %s20
        %s358 = smul.u32 16, %s20
        %p359 = scmp.lt.s32.totalorder %s358, 63
        %s360 = scalar_select %p359, %s358, 63
        %s361 = smul.addr %s360, 8
        %s362 = scalar_lea.vmem %s3, %s361
        %s363 = smul.u32 16, %s20
        %s364 = smul.u32 16, %s20
        %p365 = scmp.lt.s32.totalorder %s364, 63
        %s366 = scalar_select %p365, %s364, 63
        %s367 = smul.addr %s366, 8
        %s368 = scalar_lea.vmem %s4, %s367
        %s369 = smul.u32 16, %s20
        %p370 = scmp.eq.s32.totalorder %s21, 0
        // Predicated region
        $region71: #{lgcn_encoder_forward.3} parent=65 // pred_check
          %p371 = pneg %p370
        $region72: #{lgcn_encoder_forward.3} parent=65 // pred_check_branch
          %373 = sbr.rel (%p371) target = $region74
        $region73: #{lgcn_encoder_forward.3} parent=65 // pred_region
          %374 = vst [vmem:[#allocation2] sm:$0xff] 0.0
          %375 = vst [vmem:[#allocation2 + $0x8] sm:$0xff] 0.0
          %376 = vst [vmem:[#allocation2 + $0x10] sm:$0xff] 0.0
          %377 = vst [vmem:[#allocation2 + $0x18] sm:$0xff] 0.0
          %378 = vst [vmem:[#allocation2 + $0x20] sm:$0xff] 0.0
          %379 = vst [vmem:[#allocation2 + $0x28] sm:$0xff] 0.0
          %380 = vst [vmem:[#allocation2 + $0x30] sm:$0xff] 0.0
          %381 = vst [vmem:[#allocation2 + $0x38] sm:$0xff] 0.0
          %382 = vst [vmem:[#allocation2 + $0x40] sm:$0xff] 0.0
          %383 = vst [vmem:[#allocation2 + $0x48] sm:$0xff] 0.0
          %384 = vst [vmem:[#allocation2 + $0x50] sm:$0xff] 0.0
          %385 = vst [vmem:[#allocation2 + $0x58] sm:$0xff] 0.0
          %386 = vst [vmem:[#allocation2 + $0x60] sm:$0xff] 0.0
          %387 = vst [vmem:[#allocation2 + $0x68] sm:$0xff] 0.0
          %388 = vst [vmem:[#allocation2 + $0x70] sm:$0xff] 0.0
          %389 = vst [vmem:[#allocation2 + $0x78] sm:$0xff] 0.0
        $region74: #{lgcn_encoder_forward.3} parent=65 // pred_fallthru
          _
        %v390 = vld [vmem:[#allocation2] sm:$0xff]
        %v391 = vld [vmem:[#allocation2 + $0x8] sm:$0xff]
        %v392 = vld [vmem:[#allocation2 + $0x10] sm:$0xff]
        %v393 = vld [vmem:[#allocation2 + $0x18] sm:$0xff]
        %v394 = vld [vmem:[#allocation2 + $0x20] sm:$0xff]
        %v395 = vld [vmem:[#allocation2 + $0x28] sm:$0xff]
        %v396 = vld [vmem:[#allocation2 + $0x30] sm:$0xff]
        %v397 = vld [vmem:[#allocation2 + $0x38] sm:$0xff]
        %v398 = vld [vmem:[#allocation2 + $0x40] sm:$0xff]
        %v399 = vld [vmem:[#allocation2 + $0x48] sm:$0xff]
        %v400 = vld [vmem:[#allocation2 + $0x50] sm:$0xff]
        %v401 = vld [vmem:[#allocation2 + $0x58] sm:$0xff]
        %v402 = vld [vmem:[#allocation2 + $0x60] sm:$0xff]
        %v403 = vld [vmem:[#allocation2 + $0x68] sm:$0xff]
        %v404 = vld [vmem:[#allocation2 + $0x70] sm:$0xff]
        %v405 = vld [vmem:[#allocation2 + $0x78] sm:$0xff]
        %v406 = vld [vmem:[%s307] sm:$0xff]
        %v407 = vld [vmem:[%s307 + $0x8] sm:$0xff]
        %v408 = vld [vmem:[%s307 + $0x10] sm:$0xff]
        %v409 = vld [vmem:[%s307 + $0x18] sm:$0xff]
        %v410 = vld [vmem:[%s307 + $0x20] sm:$0xff]
        %v411 = vld [vmem:[%s307 + $0x28] sm:$0xff]
        %v412 = vld [vmem:[%s307 + $0x30] sm:$0xff]
        %v413 = vld [vmem:[%s307 + $0x38] sm:$0xff]
        %v414 = vld [vmem:[%s307 + $0x40] sm:$0xff]
        %v415 = vld [vmem:[%s307 + $0x48] sm:$0xff]
        %v416 = vld [vmem:[%s307 + $0x50] sm:$0xff]
        %v417 = vld [vmem:[%s307 + $0x58] sm:$0xff]
        %v418 = vld [vmem:[%s307 + $0x60] sm:$0xff]
        %v419 = vld [vmem:[%s307 + $0x68] sm:$0xff]
        %v420 = vld [vmem:[%s307 + $0x70] sm:$0xff]
        %v421 = vld [vmem:[%s307 + $0x78] sm:$0xff]
        %v422 = vld [vmem:[%s350] sm:$0xff]
        %v423 = vld [vmem:[%s350 + $0x8] sm:$0xff]
        %v424 = vld [vmem:[%s350 + $0x10] sm:$0xff]
        %v425 = vld [vmem:[%s350 + $0x18] sm:$0xff]
        %v426 = vld [vmem:[%s350 + $0x20] sm:$0xff]
        %v427 = vld [vmem:[%s350 + $0x28] sm:$0xff]
        %v428 = vld [vmem:[%s350 + $0x30] sm:$0xff]
        %v429 = vld [vmem:[%s350 + $0x38] sm:$0xff]
        %v430 = vld [vmem:[%s350 + $0x40] sm:$0xff]
        %v431 = vld [vmem:[%s350 + $0x48] sm:$0xff]
        %v432 = vld [vmem:[%s350 + $0x50] sm:$0xff]
        %v433 = vld [vmem:[%s350 + $0x58] sm:$0xff]
        %v434 = vld [vmem:[%s350 + $0x60] sm:$0xff]
        %v435 = vld [vmem:[%s350 + $0x68] sm:$0xff]
        %v436 = vld [vmem:[%s350 + $0x70] sm:$0xff]
        %v437 = vld [vmem:[%s350 + $0x78] sm:$0xff]
        %438 = vmatprep.subr.mxu0 0.0
        %439 = vmatpush1.msra.mxu0 %v437
        %440 = vmatprep.subr.mxu0 0.0
        %441 = vmatpush1.msra.mxu0 %v436
        %442 = vmatprep.subr.mxu0 0.0
        %443 = vmatpush1.msra.mxu0 %v435
        %444 = vmatprep.subr.mxu0 0.0
        %445 = vmatpush1.msra.mxu0 %v434
        %446 = vmatprep.subr.mxu0 0.0
        %447 = vmatpush1.msra.mxu0 %v433
        %448 = vmatprep.subr.mxu0 0.0
        %449 = vmatpush1.msra.mxu0 %v432
        %450 = vmatprep.subr.mxu0 0.0
        %451 = vmatpush1.msra.mxu0 %v431
        %452 = vmatprep.subr.mxu0 0.0
        %453 = vmatpush1.msra.mxu0 %v430
        %454 = vmatprep.subr.mxu0 0.0
        %455 = vmatpush1.msra.mxu0 %v429
        %456 = vmatprep.subr.mxu0 0.0
        %457 = vmatpush1.msra.mxu0 %v428
        %458 = vmatprep.subr.mxu0 0.0
        %459 = vmatpush1.msra.mxu0 %v427
        %460 = vmatprep.subr.mxu0 0.0
        %461 = vmatpush1.msra.mxu0 %v426
        %462 = vmatprep.subr.mxu0 0.0
        %463 = vmatpush1.msra.mxu0 %v425
        %464 = vmatprep.subr.mxu0 0.0
        %465 = vmatpush1.msra.mxu0 %v424
        %466 = vmatprep.subr.mxu0 0.0
        %467 = vmatpush1.msra.mxu0 %v423
        %468 = vmatprep.subr.mxu0 0.0
        %469 = vmatpush1.msra.mxu0 %v422
        %470 = vmatprep.subr.mxu0 0.0
        %471 = vmatpush2.msra.mxu0 0.0
        %472 = vmatprep.subr.mxu0 0.0
        %473 = vmatpush2.msra.mxu0 0.0
        %474 = vmatprep.subr.mxu0 0.0
        %475 = vmatpush2.msra.mxu0 0.0
        %476 = vmatprep.subr.mxu0 0.0
        %477 = vmatpush2.msra.mxu0 0.0
        %478 = vmatprep.subr.mxu0 0.0
        %479 = vmatpush2.msra.mxu0 0.0
        %480 = vmatprep.subr.mxu0 0.0
        %481 = vmatpush2.msra.mxu0 0.0
        %482 = vmatprep.subr.mxu0 0.0
        %483 = vmatpush2.msra.mxu0 0.0
        %484 = vmatprep.subr.mxu0 0.0
        %485 = vmatpush2.msra.mxu0 0.0
        %486 = vmatprep.subr.mxu0 0.0
        %487 = vmatpush2.msra.mxu0 0.0
        %488 = vmatprep.subr.mxu0 0.0
        %489 = vmatpush2.msra.mxu0 0.0
        %490 = vmatprep.subr.mxu0 0.0
        %491 = vmatpush2.msra.mxu0 0.0
        %492 = vmatprep.subr.mxu0 0.0
        %493 = vmatpush2.msra.mxu0 0.0
        %494 = vmatprep.subr.mxu0 0.0
        %495 = vmatpush2.msra.mxu0 0.0
        %496 = vmatprep.subr.mxu0 0.0
        %497 = vmatpush2.msra.mxu0 0.0
        %498 = vmatprep.subr.mxu0 0.0
        %499 = vmatpush2.msra.mxu0 0.0
        %500 = vmatprep.subr.mxu0 0.0
        %501 = vmatpush2.msra.mxu0 0.0
        %502 = vmatprep.mubr.f32.mxu0 0.0
        %503 = vmatmul.mubr.f32.gmra.mxu0 %v406
        %v504 = vpop.f32.mrf.mxu0
        %v505 = vadd.f32 0.0, %v504
        %v506 = vpop.f32.mrf.mxu0
        %507 = vmatprep.mubr.f32.mxu0 0.0
        %508 = vmatmul.mubr.f32.gmra.mxu0 %v407
        %v509 = vpop.f32.mrf.mxu0
        %v510 = vadd.f32 0.0, %v509
        %v511 = vpop.f32.mrf.mxu0
        %512 = vmatprep.mubr.f32.mxu0 0.0
        %513 = vmatmul.mubr.f32.gmra.mxu0 %v408
        %v514 = vpop.f32.mrf.mxu0
        %v515 = vadd.f32 0.0, %v514
        %v516 = vpop.f32.mrf.mxu0
        %517 = vmatprep.mubr.f32.mxu0 0.0
        %518 = vmatmul.mubr.f32.gmra.mxu0 %v409
        %v519 = vpop.f32.mrf.mxu0
        %v520 = vadd.f32 0.0, %v519
        %v521 = vpop.f32.mrf.mxu0
        %522 = vmatprep.mubr.f32.mxu0 0.0
        %523 = vmatmul.mubr.f32.gmra.mxu0 %v410
        %v524 = vpop.f32.mrf.mxu0
        %v525 = vadd.f32 0.0, %v524
        %v526 = vpop.f32.mrf.mxu0
        %527 = vmatprep.mubr.f32.mxu0 0.0
        %528 = vmatmul.mubr.f32.gmra.mxu0 %v411
        %v529 = vpop.f32.mrf.mxu0
        %v530 = vadd.f32 0.0, %v529
        %v531 = vpop.f32.mrf.mxu0
        %532 = vmatprep.mubr.f32.mxu0 0.0
        %533 = vmatmul.mubr.f32.gmra.mxu0 %v412
        %v534 = vpop.f32.mrf.mxu0
        %v535 = vadd.f32 0.0, %v534
        %v536 = vpop.f32.mrf.mxu0
        %537 = vmatprep.mubr.f32.mxu0 0.0
        %538 = vmatmul.mubr.f32.gmra.mxu0 %v413
        %v539 = vpop.f32.mrf.mxu0
        %v540 = vadd.f32 0.0, %v539
        %v541 = vpop.f32.mrf.mxu0
        %542 = vmatprep.mubr.f32.mxu0 0.0
        %543 = vmatmul.mubr.f32.gmra.mxu0 %v414
        %v544 = vpop.f32.mrf.mxu0
        %v545 = vadd.f32 0.0, %v544
        %v546 = vpop.f32.mrf.mxu0
        %547 = vmatprep.mubr.f32.mxu0 0.0
        %548 = vmatmul.mubr.f32.gmra.mxu0 %v415
        %v549 = vpop.f32.mrf.mxu0
        %v550 = vadd.f32 0.0, %v549
        %v551 = vpop.f32.mrf.mxu0
        %552 = vmatprep.mubr.f32.mxu0 0.0
        %553 = vmatmul.mubr.f32.gmra.mxu0 %v416
        %v554 = vpop.f32.mrf.mxu0
        %v555 = vadd.f32 0.0, %v554
        %v556 = vpop.f32.mrf.mxu0
        %557 = vmatprep.mubr.f32.mxu0 0.0
        %558 = vmatmul.mubr.f32.gmra.mxu0 %v417
        %v559 = vpop.f32.mrf.mxu0
        %v560 = vadd.f32 0.0, %v559
        %v561 = vpop.f32.mrf.mxu0
        %562 = vmatprep.mubr.f32.mxu0 0.0
        %563 = vmatmul.mubr.f32.gmra.mxu0 %v418
        %v564 = vpop.f32.mrf.mxu0
        %v565 = vadd.f32 0.0, %v564
        %v566 = vpop.f32.mrf.mxu0
        %567 = vmatprep.mubr.f32.mxu0 0.0
        %568 = vmatmul.mubr.f32.gmra.mxu0 %v419
        %v569 = vpop.f32.mrf.mxu0
        %v570 = vadd.f32 0.0, %v569
        %v571 = vpop.f32.mrf.mxu0
        %572 = vmatprep.mubr.f32.mxu0 0.0
        %573 = vmatmul.mubr.f32.gmra.mxu0 %v420
        %v574 = vpop.f32.mrf.mxu0
        %v575 = vadd.f32 0.0, %v574
        %v576 = vpop.f32.mrf.mxu0
        %577 = vmatprep.mubr.f32.mxu0 0.0
        %578 = vmatmul.mubr.f32.gmra.mxu0 %v421
        %v579 = vpop.f32.mrf.mxu0
        %v580 = vadd.f32 0.0, %v579
        %v581 = vpop.f32.mrf.mxu0
        %582 = vdwg.mxu0
        %v583 = vadd.f32 %v390, %v505
        %v584 = vadd.f32 %v391, %v510
        %v585 = vadd.f32 %v392, %v515
        %v586 = vadd.f32 %v393, %v520
        %v587 = vadd.f32 %v394, %v525
        %v588 = vadd.f32 %v395, %v530
        %v589 = vadd.f32 %v396, %v535
        %v590 = vadd.f32 %v397, %v540
        %v591 = vadd.f32 %v398, %v545
        %v592 = vadd.f32 %v399, %v550
        %v593 = vadd.f32 %v400, %v555
        %v594 = vadd.f32 %v401, %v560
        %v595 = vadd.f32 %v402, %v565
        %v596 = vadd.f32 %v403, %v570
        %v597 = vadd.f32 %v404, %v575
        %v598 = vadd.f32 %v405, %v580
        %599 = vst [vmem:[#allocation2] sm:$0xff] %v583
        %600 = vst [vmem:[#allocation2 + $0x8] sm:$0xff] %v584
        %601 = vst [vmem:[#allocation2 + $0x10] sm:$0xff] %v585
        %602 = vst [vmem:[#allocation2 + $0x18] sm:$0xff] %v586
        %603 = vst [vmem:[#allocation2 + $0x20] sm:$0xff] %v587
        %604 = vst [vmem:[#allocation2 + $0x28] sm:$0xff] %v588
        %605 = vst [vmem:[#allocation2 + $0x30] sm:$0xff] %v589
        %606 = vst [vmem:[#allocation2 + $0x38] sm:$0xff] %v590
        %607 = vst [vmem:[#allocation2 + $0x40] sm:$0xff] %v591
        %608 = vst [vmem:[#allocation2 + $0x48] sm:$0xff] %v592
        %609 = vst [vmem:[#allocation2 + $0x50] sm:$0xff] %v593
        %610 = vst [vmem:[#allocation2 + $0x58] sm:$0xff] %v594
        %611 = vst [vmem:[#allocation2 + $0x60] sm:$0xff] %v595
        %612 = vst [vmem:[#allocation2 + $0x68] sm:$0xff] %v596
        %613 = vst [vmem:[#allocation2 + $0x70] sm:$0xff] %v597
        %614 = vst [vmem:[#allocation2 + $0x78] sm:$0xff] %v598
        %p615 = scmp.eq.s32.totalorder %s21, 3
        // Predicated region
        $region75: #{lgcn_encoder_forward.3} parent=65 // pred_check
          %p616 = pneg %p615
        $region76: #{lgcn_encoder_forward.3} parent=65 // pred_check_branch
          %618 = sbr.rel (%p616) target = $region78
        $region77: #{lgcn_encoder_forward.3} parent=65 // pred_region
          %v619 = vld [vmem:[#allocation2] sm:$0xff]
          %v620 = vld [vmem:[#allocation2 + $0x8] sm:$0xff]
          %v621 = vld [vmem:[#allocation2 + $0x10] sm:$0xff]
          %v622 = vld [vmem:[#allocation2 + $0x18] sm:$0xff]
          %v623 = vld [vmem:[#allocation2 + $0x20] sm:$0xff]
          %v624 = vld [vmem:[#allocation2 + $0x28] sm:$0xff]
          %v625 = vld [vmem:[#allocation2 + $0x30] sm:$0xff]
          %v626 = vld [vmem:[#allocation2 + $0x38] sm:$0xff]
          %v627 = vld [vmem:[#allocation2 + $0x40] sm:$0xff]
          %v628 = vld [vmem:[#allocation2 + $0x48] sm:$0xff]
          %v629 = vld [vmem:[#allocation2 + $0x50] sm:$0xff]
          %v630 = vld [vmem:[#allocation2 + $0x58] sm:$0xff]
          %v631 = vld [vmem:[#allocation2 + $0x60] sm:$0xff]
          %v632 = vld [vmem:[#allocation2 + $0x68] sm:$0xff]
          %v633 = vld [vmem:[#allocation2 + $0x70] sm:$0xff]
          %v634 = vld [vmem:[#allocation2 + $0x78] sm:$0xff]
          %635 = vst [vmem:[%s362] sm:$0xff] %v619
          %636 = vst [vmem:[%s362 + $0x8] sm:$0xff] %v620
          %637 = vst [vmem:[%s362 + $0x10] sm:$0xff] %v621
          %638 = vst [vmem:[%s362 + $0x18] sm:$0xff] %v622
          %639 = vst [vmem:[%s362 + $0x20] sm:$0xff] %v623
          %640 = vst [vmem:[%s362 + $0x28] sm:$0xff] %v624
          %641 = vst [vmem:[%s362 + $0x30] sm:$0xff] %v625
          %642 = vst [vmem:[%s362 + $0x38] sm:$0xff] %v626
          %643 = vst [vmem:[%s362 + $0x40] sm:$0xff] %v627
          %644 = vst [vmem:[%s362 + $0x48] sm:$0xff] %v628
          %645 = vst [vmem:[%s362 + $0x50] sm:$0xff] %v629
          %646 = vst [vmem:[%s362 + $0x58] sm:$0xff] %v630
          %647 = vst [vmem:[%s362 + $0x60] sm:$0xff] %v631
          %648 = vst [vmem:[%s362 + $0x68] sm:$0xff] %v632
          %649 = vst [vmem:[%s362 + $0x70] sm:$0xff] %v633
          %650 = vst [vmem:[%s362 + $0x78] sm:$0xff] %v634
          %v651 = vld [vmem:[%s356] sm:$0xff]
          %v652 = vld [vmem:[%s356 + $0x8] sm:$0xff]
          %v653 = vld [vmem:[%s356 + $0x10] sm:$0xff]
          %v654 = vld [vmem:[%s356 + $0x18] sm:$0xff]
          %v655 = vld [vmem:[%s356 + $0x20] sm:$0xff]
          %v656 = vld [vmem:[%s356 + $0x28] sm:$0xff]
          %v657 = vld [vmem:[%s356 + $0x30] sm:$0xff]
          %v658 = vld [vmem:[%s356 + $0x38] sm:$0xff]
          %v659 = vld [vmem:[%s356 + $0x40] sm:$0xff]
          %v660 = vld [vmem:[%s356 + $0x48] sm:$0xff]
          %v661 = vld [vmem:[%s356 + $0x50] sm:$0xff]
          %v662 = vld [vmem:[%s356 + $0x58] sm:$0xff]
          %v663 = vld [vmem:[%s356 + $0x60] sm:$0xff]
          %v664 = vld [vmem:[%s356 + $0x68] sm:$0xff]
          %v665 = vld [vmem:[%s356 + $0x70] sm:$0xff]
          %v666 = vld [vmem:[%s356 + $0x78] sm:$0xff]
          %v667 = vld [vmem:[#allocation2] sm:$0xff]
          %v668 = vld [vmem:[#allocation2 + $0x8] sm:$0xff]
          %v669 = vld [vmem:[#allocation2 + $0x10] sm:$0xff]
          %v670 = vld [vmem:[#allocation2 + $0x18] sm:$0xff]
          %v671 = vld [vmem:[#allocation2 + $0x20] sm:$0xff]
          %v672 = vld [vmem:[#allocation2 + $0x28] sm:$0xff]
          %v673 = vld [vmem:[#allocation2 + $0x30] sm:$0xff]
          %v674 = vld [vmem:[#allocation2 + $0x38] sm:$0xff]
          %v675 = vld [vmem:[#allocation2 + $0x40] sm:$0xff]
          %v676 = vld [vmem:[#allocation2 + $0x48] sm:$0xff]
          %v677 = vld [vmem:[#allocation2 + $0x50] sm:$0xff]
          %v678 = vld [vmem:[#allocation2 + $0x58] sm:$0xff]
          %v679 = vld [vmem:[#allocation2 + $0x60] sm:$0xff]
          %v680 = vld [vmem:[#allocation2 + $0x68] sm:$0xff]
          %v681 = vld [vmem:[#allocation2 + $0x70] sm:$0xff]
          %v682 = vld [vmem:[#allocation2 + $0x78] sm:$0xff]
          %v683 = vadd.f32 %v651, %v667
          %v684 = vadd.f32 %v652, %v668
          %v685 = vadd.f32 %v653, %v669
          %v686 = vadd.f32 %v654, %v670
          %v687 = vadd.f32 %v655, %v671
          %v688 = vadd.f32 %v656, %v672
          %v689 = vadd.f32 %v657, %v673
          %v690 = vadd.f32 %v658, %v674
          %v691 = vadd.f32 %v659, %v675
          %v692 = vadd.f32 %v660, %v676
          %v693 = vadd.f32 %v661, %v677
          %v694 = vadd.f32 %v662, %v678
          %v695 = vadd.f32 %v663, %v679
          %v696 = vadd.f32 %v664, %v680
          %v697 = vadd.f32 %v665, %v681
          %v698 = vadd.f32 %v666, %v682
          %699 = vst [vmem:[%s368] sm:$0xff] %v683
          %700 = vst [vmem:[%s368 + $0x8] sm:$0xff] %v684
          %701 = vst [vmem:[%s368 + $0x10] sm:$0xff] %v685
          %702 = vst [vmem:[%s368 + $0x18] sm:$0xff] %v686
          %703 = vst [vmem:[%s368 + $0x20] sm:$0xff] %v687
          %704 = vst [vmem:[%s368 + $0x28] sm:$0xff] %v688
          %705 = vst [vmem:[%s368 + $0x30] sm:$0xff] %v689
          %706 = vst [vmem:[%s368 + $0x38] sm:$0xff] %v690
          %707 = vst [vmem:[%s368 + $0x40] sm:$0xff] %v691
          %708 = vst [vmem:[%s368 + $0x48] sm:$0xff] %v692
          %709 = vst [vmem:[%s368 + $0x50] sm:$0xff] %v693
          %710 = vst [vmem:[%s368 + $0x58] sm:$0xff] %v694
          %711 = vst [vmem:[%s368 + $0x60] sm:$0xff] %v695
          %712 = vst [vmem:[%s368 + $0x68] sm:$0xff] %v696
          %713 = vst [vmem:[%s368 + $0x70] sm:$0xff] %v697
          %714 = vst [vmem:[%s368 + $0x78] sm:$0xff] %v698
        $region78: #{lgcn_encoder_forward.3} parent=65 // pred_fallthru
          _
        %s715 = smul.u32 16, %s20
        %p716 = scmp.lt.s32.totalorder %s715, 63
        %s717 = scalar_select %p716, %s715, 63
        %s718 = smul.addr %s717, 8
        %s719 = scalar_lea.vmem %s3, %s718
        %s720 = smul.u32 16, %s20
        %p721 = scmp.lt.s32.totalorder %s720, 63
        %s722 = scalar_select %p721, %s720, 63
        %s723 = smul.addr %s722, 8
        %s724 = scalar_lea.vmem %s4, %s723
        // Predicated region
        $region79: #{lgcn_encoder_forward.3} parent=65 // pred_check
          %p725 = pneg %p126
        $region80: #{lgcn_encoder_forward.3} parent=65 // pred_check_branch
          %727 = sbr.rel (%p725) target = $region82
        $region81: #{lgcn_encoder_forward.3} parent=65 // pred_region
          %s728 = smul.u32 16, %s20
        $region82: #{lgcn_encoder_forward.3} parent=65 // pred_fallthru
          _
        // Predicated region
        $region83: #{lgcn_encoder_forward.3} parent=65 // pred_check
          %p729 = pneg %p152
        $region84: #{lgcn_encoder_forward.3} parent=65 // pred_check_branch
          %731 = sbr.rel (%p729) target = $region86
        $region85: #{lgcn_encoder_forward.3} parent=65 // pred_region
          %s732 = smul.u32 16, %s20
        $region86: #{lgcn_encoder_forward.3} parent=65 // pred_fallthru
          _
      $region66: #{lgcn_encoder_forward.3} parent=5 // pred_fallthru
        _
      %p733 = scmp.le.s32.totalorder 2, %s11
      // Predicated region
      $region87: #{lgcn_encoder_forward.3} parent=5 // pred_check
        %p734 = pneg %p733
      $region88: #{lgcn_encoder_forward.3} parent=5 // pred_check_branch
        %736 = sbr.rel (%p734) target = $region90
      $region89: #{lgcn_encoder_forward.3} parent=5 // pred_region
        %s737 = ssub.s32 %s11, 2
        // Predicated region
        $region91: #{lgcn_encoder_forward.3} parent=89 // pred_check
          %p738 = pneg %p132
        $region92: #{lgcn_encoder_forward.3} parent=89 // pred_check_branch
          %740 = sbr.rel (%p738) target = $region94
        $region93: #{lgcn_encoder_forward.3} parent=89 // pred_region
          %s741 = smul.u32 16, %s22
          %p742 = scmp.lt.s32.totalorder %s741, 63
          %s743 = scalar_select %p742, %s741, 63
          %s744 = smul.addr %s743, 8
          %s745 = scalar_lea.vmem %s3, %s744
        $region94: #{lgcn_encoder_forward.3} parent=89 // pred_fallthru
          _
        // Predicated region
        $region95: #{lgcn_encoder_forward.3} parent=89 // pred_check
          %p746 = pneg %p158
        $region96: #{lgcn_encoder_forward.3} parent=89 // pred_check_branch
          %748 = sbr.rel (%p746) target = $region98
        $region97: #{lgcn_encoder_forward.3} parent=89 // pred_region
          %s749 = smul.u32 16, %s22
          %p750 = scmp.lt.s32.totalorder %s749, 63
          %s751 = scalar_select %p750, %s749, 63
          %s752 = smul.addr %s751, 8
          %s753 = scalar_lea.vmem %s4, %s752
        $region98: #{lgcn_encoder_forward.3} parent=89 // pred_fallthru
          _
      $region90: #{lgcn_encoder_forward.3} parent=5 // pred_fallthru
        _
    $region6: #{lgcn_encoder_forward.3} parent=1 // loop_footer
      %s15 = sadd.s32 1, %s11
    $region7: #{lgcn_encoder_forward.3} parent=1 // loop_footer_branch
      %10 = sbr.rel target = $region3
    $region8: #{lgcn_encoder_forward.3} parent=1 // loop_exit
      _

// kernel: lgcn_encoder_forward.5
$region0: #{lgcn_encoder_forward.5}
  #allocation0 [shape = 'u32[]', space=smem, size = 0x4, offset = 0x4, fixed_abs, tag = 'smem constant byte address 0x4 - core index']
  #allocation1 [shape = 'u32[144,128]{1,0:T(1,128)}', space=vmem, size = 0x12000, scoped, tag = 'internal scratch']
  #allocation2 [shape = 'f32[128,128]{1,0:T(8,128)}', space=vmem, size = 0x10000, scoped, tag = 'scratch operand']
  %s0 = inlined_call_operand.vmem [shape: f32[512,512], index: 0, kind: input, shape index: {}]
  %s1 = inlined_call_operand.vmem [shape: f32[512,128], index: 1, kind: input, shape index: {}]
  %s2 = inlined_call_operand.vmem [shape: f32[512,128], index: 2, kind: input, shape index: {}, may-alias: {2,4}]
  %s3 = inlined_call_operand.hbm [shape: f32[512,128], index: 3, kind: output, shape index: {0}]
  %s4 = inlined_call_operand.vmem [shape: f32[512,128], index: 4, kind: output, shape index: {1}, may-alias: {2,4}]
  %5 = xla_tuple %s3, %s4
  %s6 = sld [smem:[#allocation0]]
  $region99: #{lgcn_encoder_forward.5} parent=0
    _
  %s8 = ssub.s32 1, %s6
  %s9 = scalar_select 0, %s8, %s6
  $region1: #{lgcn_encoder_forward.5} parent=0
    #allocation3 [shape = 'u8[131072]{0}', space=vmem, size = 0x20000, scoped, tag = 'input window, operand 0']
    #allocation4 [shape = 'u8[131072]{0}', space=vmem, size = 0x20000, scoped, tag = 'output window, operand 0']
    #allocation5 [shape = 's32[2]{0}', space=sflag, size = 0x8, scoped, tag = 'scoped memory for lgcn_encoder_forward.5']
    %10 = vsyncpa [#allocation5], 0
    %s11 = scalar_lea.sflag [#allocation5], 1
    %12 = vsyncpa %s11, 0
    loop: start=0, step=1, limit=18
    $region2: #{lgcn_encoder_forward.5} parent=1 // loop_pre_header
      _
    $region3: #{lgcn_encoder_forward.5} parent=1 // loop_header
      %s14 = sphi 0, %s18
      %p15 = scmp.ge.s32.totalorder %s14, 18
      %s21 = sphi 0, %s33
      %s22 = sphi 0, %s29
      %s23 = sphi 0, %s21
      %s24 = sphi 0, %s22
      %s25 = sphi 0, %s23
      %s26 = sphi 0, %s24
      %s38 = sphi 0, %s40
      %s41 = sphi 0, %s38
      %s42 = sphi 0, %s41
      %s58 = sphi 0, %s42
      %s64 = sphi 0, %s66
      %s67 = sphi 0, %s64
      %s68 = sphi 0, %s67
      %s84 = sphi 0, %s68
      %s90 = sphi 0, %s92
      %s93 = sphi 0, %s90
      %s94 = sphi 0, %s93
      %s110 = sphi 0, %s94
      %s116 = sphi 0, %s118
      %s119 = sphi 0, %s116
      %s120 = sphi 0, %s119
      %s136 = sphi 0, %s120
      %s142 = sphi 0, %s144
      %s145 = sphi 0, %s142
      %s146 = sphi 0, %s145
      %s162 = sphi 0, %s146
    $region4: #{lgcn_encoder_forward.5} parent=1 // loop_header_branch
      %17 = sbr.rel (%p15) target = $region8
    $region5: #{lgcn_encoder_forward.5} parent=1 // loop_body
      %s19 = ssub.s32 %s14, 1
      %s20 = ssub.s32 %s14, 2
      %s27 = sadd.s32 1, %s22
      %p28 = scmp.ge.s32.totalorder %s27, 4
      %s29 = scalar_select %p28, 0, %s27
      %s30 = sadd.s32 1, %s21
      %s31 = scalar_select %p28, %s30, %s21
      %p32 = scmp.ge.s32.totalorder %s31, 4
      %s33 = scalar_select %p32, 0, %s31
      %s34 = ssub.s32 %s21, %s33
      %s35 = ssub.s32 %s22, %s29
      %s36 = sor.u32 %s34, %s35
      %p37 = scmp.eq.s32.totalorder %s36, 0
      %s39 = sadd.s32 %s38, 1
      %s40 = scalar_select %p37, %s38, %s39
      %p43 = pneg %p37
      %p44 = scmp.eq.s32.totalorder %s14, 15
      %p45 = por %p43, %p44
      %p46 = scmp.ne.s32.totalorder %s38, %s41
      %p47 = scmp.eq.s32.totalorder %s14, 0
      %p48 = por %p46, %p47
      %p49 = scmp.ne.s32.totalorder %s38, %s41
      %p50 = scmp.eq.s32.totalorder %s19, 15
      %p51 = por %p49, %p50
      %p52 = scmp.ne.s32.totalorder %s41, %s42
      %p53 = scmp.eq.s32.totalorder %s19, 0
      %p54 = por %p52, %p53
      %p55 = scmp.ne.s32.totalorder %s41, %s42
      %p56 = scmp.eq.s32.totalorder %s20, 15
      %p57 = por %p55, %p56
      %p59 = scmp.ne.s32.totalorder %s42, %s58
      %p60 = scmp.eq.s32.totalorder %s20, 0
      %p61 = por %p59, %p60
      %s62 = ssub.s32 %s22, %s29
      %p63 = scmp.eq.s32.totalorder %s62, 0
      %s65 = sadd.s32 %s64, 1
      %s66 = scalar_select %p63, %s64, %s65
      %p69 = pneg %p63
      %p70 = scmp.eq.s32.totalorder %s14, 15
      %p71 = por %p69, %p70
      %p72 = scmp.ne.s32.totalorder %s64, %s67
      %p73 = scmp.eq.s32.totalorder %s14, 0
      %p74 = por %p72, %p73
      %p75 = scmp.ne.s32.totalorder %s64, %s67
      %p76 = scmp.eq.s32.totalorder %s19, 15
      %p77 = por %p75, %p76
      %p78 = scmp.ne.s32.totalorder %s67, %s68
      %p79 = scmp.eq.s32.totalorder %s19, 0
      %p80 = por %p78, %p79
      %p81 = scmp.ne.s32.totalorder %s67, %s68
      %p82 = scmp.eq.s32.totalorder %s20, 15
      %p83 = por %p81, %p82
      %p85 = scmp.ne.s32.totalorder %s68, %s84
      %p86 = scmp.eq.s32.totalorder %s20, 0
      %p87 = por %p85, %p86
      %s88 = ssub.s32 %s21, %s33
      %p89 = scmp.eq.s32.totalorder %s88, 0
      %s91 = sadd.s32 %s90, 1
      %s92 = scalar_select %p89, %s90, %s91
      %p95 = pneg %p89
      %p96 = scmp.eq.s32.totalorder %s14, 15
      %p97 = por %p95, %p96
      %p98 = scmp.ne.s32.totalorder %s90, %s93
      %p99 = scmp.eq.s32.totalorder %s14, 0
      %p100 = por %p98, %p99
      %p101 = scmp.ne.s32.totalorder %s90, %s93
      %p102 = scmp.eq.s32.totalorder %s19, 15
      %p103 = por %p101, %p102
      %p104 = scmp.ne.s32.totalorder %s93, %s94
      %p105 = scmp.eq.s32.totalorder %s19, 0
      %p106 = por %p104, %p105
      %p107 = scmp.ne.s32.totalorder %s93, %s94
      %p108 = scmp.eq.s32.totalorder %s20, 15
      %p109 = por %p107, %p108
      %p111 = scmp.ne.s32.totalorder %s94, %s110
      %p112 = scmp.eq.s32.totalorder %s20, 0
      %p113 = por %p111, %p112
      %s114 = ssub.s32 %s21, %s33
      %p115 = scmp.eq.s32.totalorder %s114, 0
      %s117 = sadd.s32 %s116, 1
      %s118 = scalar_select %p115, %s116, %s117
      %p121 = pneg %p115
      %p122 = scmp.eq.s32.totalorder %s14, 15
      %p123 = por %p121, %p122
      %p124 = scmp.ne.s32.totalorder %s116, %s119
      %p125 = scmp.eq.s32.totalorder %s14, 0
      %p126 = por %p124, %p125
      %p127 = scmp.ne.s32.totalorder %s116, %s119
      %p128 = scmp.eq.s32.totalorder %s19, 15
      %p129 = por %p127, %p128
      %p130 = scmp.ne.s32.totalorder %s119, %s120
      %p131 = scmp.eq.s32.totalorder %s19, 0
      %p132 = por %p130, %p131
      %p133 = scmp.ne.s32.totalorder %s119, %s120
      %p134 = scmp.eq.s32.totalorder %s20, 15
      %p135 = por %p133, %p134
      %p137 = scmp.ne.s32.totalorder %s120, %s136
      %p138 = scmp.eq.s32.totalorder %s20, 0
      %p139 = por %p137, %p138
      %s140 = ssub.s32 %s21, %s33
      %p141 = scmp.eq.s32.totalorder %s140, 0
      %s143 = sadd.s32 %s142, 1
      %s144 = scalar_select %p141, %s142, %s143
      %p147 = pneg %p141
      %p148 = scmp.eq.s32.totalorder %s14, 15
      %p149 = por %p147, %p148
      %p150 = scmp.ne.s32.totalorder %s142, %s145
      %p151 = scmp.eq.s32.totalorder %s14, 0
      %p152 = por %p150, %p151
      %p153 = scmp.ne.s32.totalorder %s142, %s145
      %p154 = scmp.eq.s32.totalorder %s19, 15
      %p155 = por %p153, %p154
      %p156 = scmp.ne.s32.totalorder %s145, %s146
      %p157 = scmp.eq.s32.totalorder %s19, 0
      %p158 = por %p156, %p157
      %p159 = scmp.ne.s32.totalorder %s145, %s146
      %p160 = scmp.eq.s32.totalorder %s20, 15
      %p161 = por %p159, %p160
      %p163 = scmp.ne.s32.totalorder %s146, %s162
      %p164 = scmp.eq.s32.totalorder %s20, 0
      %p165 = por %p163, %p164
      %p166 = scmp.le.s32.totalorder 1, %s14
      %p167 = scmp.lt.s32.totalorder %s14, 17
      %p168 = pnand %p166, %p167
      %p169 = pneg %p168
      // Predicated region
      $region9: #{lgcn_encoder_forward.5} parent=5 // pred_check
        _
      $region10: #{lgcn_encoder_forward.5} parent=5 // pred_check_branch
        %171 = sbr.rel (%p168) target = $region12
      $region11: #{lgcn_encoder_forward.5} parent=5 // pred_region
        %s172 = ssub.s32 %s14, 1
      $region12: #{lgcn_encoder_forward.5} parent=5 // pred_fallthru
        _
      %p173 = scmp.lt.s32.totalorder %s14, 16
      // Predicated region
      $region13: #{lgcn_encoder_forward.5} parent=5 // pred_check
        %p174 = pneg %p173
      $region14: #{lgcn_encoder_forward.5} parent=5 // pred_check_branch
        %176 = sbr.rel (%p174) target = $region16
      $region15: #{lgcn_encoder_forward.5} parent=5 // pred_region
        // Predicated region
        $region17: #{lgcn_encoder_forward.5} parent=15 // pred_check
          %p177 = pneg %p48
        $region18: #{lgcn_encoder_forward.5} parent=15 // pred_check_branch
          %179 = sbr.rel (%p177) target = $region20
        $region19: #{lgcn_encoder_forward.5} parent=15 // pred_region
          %s180 = sand.u32 %s38, 1
          %s181 = sand.u32 %s38, 1
          %s182 = smul.addr %s181, 128
          %s183 = scalar_lea.vmem [#allocation3], %s182
          %s184 = smul.u32 16, %s21
          %s185 = smul.addr %s184, 4
          %s186 = sadd.s32 %s22, %s185
          %s187 = smul.addr %s186, 8
          %s188 = scalar_lea.vmem %s0, %s187
          // Predicated region
          $region21: #{lgcn_encoder_forward.5} parent=19 // pred_check
            _
          $region22: #{lgcn_encoder_forward.5} parent=19 // pred_check_branch
            %190 = sbr.rel (0) target = $region24
          $region23: #{lgcn_encoder_forward.5} parent=19 // pred_region
            // Predicated region
            $region25: #{lgcn_encoder_forward.5} parent=23 // pred_check
              _
            $region26: #{lgcn_encoder_forward.5} parent=23 // pred_check_branch
              %192 = sbr.rel (0) target = $region28
            $region27: #{lgcn_encoder_forward.5} parent=23 // pred_region
              // Predicated region
              $region40: #{lgcn_encoder_forward.5} parent=27 // pred_check
                _
              $region41: #{lgcn_encoder_forward.5} parent=27 // pred_check_branch
                %238 = sbr.rel (0) target = $region43
              $region42: #{lgcn_encoder_forward.5} parent=27 // pred_region
                loop: start=0, step=1, limit=1
                $region44: #{lgcn_encoder_forward.5} parent=42 // loop_pre_header
                  _
                $region45: #{lgcn_encoder_forward.5} parent=42 // loop_header
                  %s240 = sphi 0, %s244
                  %p241 = scmp.ge.s32.totalorder %s240, 1
                  %s245 = sphi %s188, %s188
                  %s246 = sphi %s183, %s183
                $region46: #{lgcn_encoder_forward.5} parent=42 // loop_header_branch
                  %243 = sbr.rel (%p241) target = $region50
                $region47: #{lgcn_encoder_forward.5} parent=42 // loop_body
                  %v247 = vld [vmem:[%s245] sm:$0xff]
                  %248 = vst [vmem:[%s246] sm:$0xff] %v247
                  %v249 = vld [vmem:[%s245 + $0x20] sm:$0xff]
                  %250 = vst [vmem:[%s246 + $0x8] sm:$0xff] %v249
                  %v251 = vld [vmem:[%s245 + $0x40] sm:$0xff]
                  %252 = vst [vmem:[%s246 + $0x10] sm:$0xff] %v251
                  %v253 = vld [vmem:[%s245 + $0x60] sm:$0xff]
                  %254 = vst [vmem:[%s246 + $0x18] sm:$0xff] %v253
                  %v255 = vld [vmem:[%s245 + $0x80] sm:$0xff]
                  %256 = vst [vmem:[%s246 + $0x20] sm:$0xff] %v255
                  %v257 = vld [vmem:[%s245 + $0xa0] sm:$0xff]
                  %258 = vst [vmem:[%s246 + $0x28] sm:$0xff] %v257
                  %v259 = vld [vmem:[%s245 + $0xc0] sm:$0xff]
                  %260 = vst [vmem:[%s246 + $0x30] sm:$0xff] %v259
                  %v261 = vld [vmem:[%s245 + $0xe0] sm:$0xff]
                  %262 = vst [vmem:[%s246 + $0x38] sm:$0xff] %v261
                  %v263 = vld [vmem:[%s245 + $0x100] sm:$0xff]
                  %264 = vst [vmem:[%s246 + $0x40] sm:$0xff] %v263
                  %v265 = vld [vmem:[%s245 + $0x120] sm:$0xff]
                  %266 = vst [vmem:[%s246 + $0x48] sm:$0xff] %v265
                  %v267 = vld [vmem:[%s245 + $0x140] sm:$0xff]
                  %268 = vst [vmem:[%s246 + $0x50] sm:$0xff] %v267
                  %v269 = vld [vmem:[%s245 + $0x160] sm:$0xff]
                  %270 = vst [vmem:[%s246 + $0x58] sm:$0xff] %v269
                  %v271 = vld [vmem:[%s245 + $0x180] sm:$0xff]
                  %272 = vst [vmem:[%s246 + $0x60] sm:$0xff] %v271
                  %v273 = vld [vmem:[%s245 + $0x1a0] sm:$0xff]
                  %274 = vst [vmem:[%s246 + $0x68] sm:$0xff] %v273
                  %v275 = vld [vmem:[%s245 + $0x1c0] sm:$0xff]
                  %276 = vst [vmem:[%s246 + $0x70] sm:$0xff] %v275
                  %v277 = vld [vmem:[%s245 + $0x1e0] sm:$0xff]
                  %278 = vst [vmem:[%s246 + $0x78] sm:$0xff] %v277
                $region48: #{lgcn_encoder_forward.5} parent=42 // loop_footer
                  %s244 = sadd.s32 1, %s240
                $region49: #{lgcn_encoder_forward.5} parent=42 // loop_footer_branch
                  %239 = sbr.rel target = $region45
                $region50: #{lgcn_encoder_forward.5} parent=42 // loop_exit
                  _
              $region43: #{lgcn_encoder_forward.5} parent=27 // pred_fallthru
                _
              // Predicated region
              $region51: #{lgcn_encoder_forward.5} parent=27 // pred_check
                _
              $region52: #{lgcn_encoder_forward.5} parent=27 // pred_check_branch
                %280 = sbr.rel target = $region54
              $region53: #{lgcn_encoder_forward.5} parent=27 // pred_region
                _
              $region54: #{lgcn_encoder_forward.5} parent=27 // pred_fallthru
                _
            $region28: #{lgcn_encoder_forward.5} parent=23 // pred_fallthru
              _
            // Predicated region
            $region29: #{lgcn_encoder_forward.5} parent=23 // pred_check
              _
            $region30: #{lgcn_encoder_forward.5} parent=23 // pred_check_branch
              %194 = sbr.rel target = $region32
            $region31: #{lgcn_encoder_forward.5} parent=23 // pred_region
              %s196 = ssub.s32 256, 1
              loop: start=0, step=1, limit=1
              $region33: #{lgcn_encoder_forward.5} parent=31 // loop_pre_header
                _
              $region34: #{lgcn_encoder_forward.5} parent=31 // loop_header
                %s198 = sphi 0, %s202
                %p199 = scmp.ge.s32.totalorder %s198, 1
                %s203 = sphi %s188, %s188
                %s204 = sphi %s183, %s183
              $region35: #{lgcn_encoder_forward.5} parent=31 // loop_header_branch
                %201 = sbr.rel (%p199) target = $region39
              $region36: #{lgcn_encoder_forward.5} parent=31 // loop_body
                %v205 = vld [vmem:[%s203] sm:%s196]
                %206 = vst [vmem:[%s204] sm:%s196] %v205
                %v207 = vld [vmem:[%s203 + $0x20] sm:%s196]
                %208 = vst [vmem:[%s204 + $0x8] sm:%s196] %v207
                %v209 = vld [vmem:[%s203 + $0x40] sm:%s196]
                %210 = vst [vmem:[%s204 + $0x10] sm:%s196] %v209
                %v211 = vld [vmem:[%s203 + $0x60] sm:%s196]
                %212 = vst [vmem:[%s204 + $0x18] sm:%s196] %v211
                %v213 = vld [vmem:[%s203 + $0x80] sm:%s196]
                %214 = vst [vmem:[%s204 + $0x20] sm:%s196] %v213
                %v215 = vld [vmem:[%s203 + $0xa0] sm:%s196]
                %216 = vst [vmem:[%s204 + $0x28] sm:%s196] %v215
                %v217 = vld [vmem:[%s203 + $0xc0] sm:%s196]
                %218 = vst [vmem:[%s204 + $0x30] sm:%s196] %v217
                %v219 = vld [vmem:[%s203 + $0xe0] sm:%s196]
                %220 = vst [vmem:[%s204 + $0x38] sm:%s196] %v219
                %v221 = vld [vmem:[%s203 + $0x100] sm:%s196]
                %222 = vst [vmem:[%s204 + $0x40] sm:%s196] %v221
                %v223 = vld [vmem:[%s203 + $0x120] sm:%s196]
                %224 = vst [vmem:[%s204 + $0x48] sm:%s196] %v223
                %v225 = vld [vmem:[%s203 + $0x140] sm:%s196]
                %226 = vst [vmem:[%s204 + $0x50] sm:%s196] %v225
                %v227 = vld [vmem:[%s203 + $0x160] sm:%s196]
                %228 = vst [vmem:[%s204 + $0x58] sm:%s196] %v227
                %v229 = vld [vmem:[%s203 + $0x180] sm:%s196]
                %230 = vst [vmem:[%s204 + $0x60] sm:%s196] %v229
                %v231 = vld [vmem:[%s203 + $0x1a0] sm:%s196]
                %232 = vst [vmem:[%s204 + $0x68] sm:%s196] %v231
                %v233 = vld [vmem:[%s203 + $0x1c0] sm:%s196]
                %234 = vst [vmem:[%s204 + $0x70] sm:%s196] %v233
                %v235 = vld [vmem:[%s203 + $0x1e0] sm:%s196]
                %236 = vst [vmem:[%s204 + $0x78] sm:%s196] %v235
              $region37: #{lgcn_encoder_forward.5} parent=31 // loop_footer
                %s202 = sadd.s32 1, %s198
              $region38: #{lgcn_encoder_forward.5} parent=31 // loop_footer_branch
                %197 = sbr.rel target = $region34
              $region39: #{lgcn_encoder_forward.5} parent=31 // loop_exit
                _
            $region32: #{lgcn_encoder_forward.5} parent=23 // pred_fallthru
              _
          $region24: #{lgcn_encoder_forward.5} parent=19 // pred_fallthru
            _
          %281 = vnop
        $region20: #{lgcn_encoder_forward.5} parent=15 // pred_fallthru
          _
        // Predicated region
        $region55: #{lgcn_encoder_forward.5} parent=15 // pred_check
          %p282 = pneg %p74
        $region56: #{lgcn_encoder_forward.5} parent=15 // pred_check_branch
          %284 = sbr.rel (%p282) target = $region58
        $region57: #{lgcn_encoder_forward.5} parent=15 // pred_region
          %s285 = smul.u32 16, %s22
          %p286 = scmp.lt.s32.totalorder %s285, 63
          %s287 = scalar_select %p286, %s285, 63
          %s288 = smul.addr %s287, 8
          %s289 = scalar_lea.vmem %s1, %s288
          %s290 = smul.u32 16, %s22
        $region58: #{lgcn_encoder_forward.5} parent=15 // pred_fallthru
          _
        // Predicated region
        $region59: #{lgcn_encoder_forward.5} parent=15 // pred_check
          %p291 = pneg %p100
        $region60: #{lgcn_encoder_forward.5} parent=15 // pred_check_branch
          %293 = sbr.rel (%p291) target = $region62
        $region61: #{lgcn_encoder_forward.5} parent=15 // pred_region
          %s294 = smul.u32 16, %s21
          %p295 = scmp.lt.s32.totalorder %s294, 63
          %s296 = scalar_select %p295, %s294, 63
          %s297 = smul.addr %s296, 8
          %s298 = scalar_lea.vmem %s2, %s297
          %s299 = smul.u32 16, %s21
        $region62: #{lgcn_encoder_forward.5} parent=15 // pred_fallthru
          _
      $region16: #{lgcn_encoder_forward.5} parent=5 // pred_fallthru
        _
      %p300 = scmp.le.s32.totalorder 1, %s14
      %p301 = scmp.lt.s32.totalorder %s14, 17
      %p302 = pnand %p300, %p301
      %p303 = pneg %p302
      // Predicated region
      $region63: #{lgcn_encoder_forward.5} parent=5 // pred_check
        _
      $region64: #{lgcn_encoder_forward.5} parent=5 // pred_check_branch
        %305 = sbr.rel (%p302) target = $region66
      $region65: #{lgcn_encoder_forward.5} parent=5 // pred_region
        %s306 = ssub.s32 %s14, 1
        %s307 = sand.u32 %s41, 1
        %s308 = sand.u32 %s41, 1
        %s309 = smul.addr %s308, 128
        %s310 = scalar_lea.vmem [#allocation3], %s309
        // Predicated region
        $region67: #{lgcn_encoder_forward.5} parent=65 // pred_check
          %p311 = pneg %p54
        $region68: #{lgcn_encoder_forward.5} parent=65 // pred_check_branch
          %313 = sbr.rel (%p311) target = $region70
        $region69: #{lgcn_encoder_forward.5} parent=65 // pred_region
          _
        $region70: #{lgcn_encoder_forward.5} parent=65 // pred_fallthru
          _
        %s314 = sand.u32 %s41, 1
        %s315 = sand.u32 %s41, 1
        %s316 = smul.addr %s315, 128
        %s317 = scalar_lea.vmem [#allocation3], %s316
        %p318 = pneg %p54
        %p319 = pneg %p51
        %s320 = smul.u32 16, %s24
        %p321 = scmp.lt.s32.totalorder %s320, 63
        %s322 = scalar_select %p321, %s320, 63
        %s323 = smul.addr %s322, 8
        %s324 = scalar_lea.vmem %s1, %s323
        %p325 = pneg %p80
        %p326 = pneg %p77
        %s327 = smul.u32 16, %s23
        %p328 = scmp.lt.s32.totalorder %s327, 63
        %s329 = scalar_select %p328, %s327, 63
        %s330 = smul.addr %s329, 8
        %s331 = scalar_lea.vmem %s2, %s330
        %p332 = pneg %p106
        %p333 = pneg %p103
        %p334 = pneg %p132
        %p335 = pneg %p129
        %s336 = sand.u32 %s119, 1
        %s337 = scalar_lea.sflag [#allocation5], %s336
        %s338 = sand.u32 %s119, 1
        %s339 = smul.addr %s338, 128
        %s340 = scalar_lea.vmem [#allocation4], %s339
        %p341 = pneg %p158
        %p342 = pneg %p155
        %s343 = smul.u32 16, %s23
        %p344 = scmp.lt.s32.totalorder %s343, 63
        %s345 = scalar_select %p344, %s343, 63
        %s346 = smul.addr %s345, 8
        %s347 = scalar_lea.vmem %s4, %s346
        %s348 = smul.u32 16, %s23
        %s349 = smul.u32 16, %s24
        %p350 = scmp.lt.s32.totalorder %s349, 63
        %s351 = scalar_select %p350, %s349, 63
        %s352 = smul.addr %s351, 8
        %s353 = scalar_lea.vmem %s1, %s352
        %s354 = smul.u32 16, %s24
        %s355 = smul.u32 16, %s23
        %p356 = scmp.lt.s32.totalorder %s355, 63
        %s357 = scalar_select %p356, %s355, 63
        %s358 = smul.addr %s357, 8
        %s359 = scalar_lea.vmem %s2, %s358
        %s360 = smul.u32 16, %s23
        %s361 = smul.u32 16, %s23
        %s362 = smul.u32 16, %s23
        %p363 = scmp.lt.s32.totalorder %s362, 63
        %s364 = scalar_select %p363, %s362, 63
        %s365 = smul.addr %s364, 8
        %s366 = scalar_lea.vmem %s4, %s365
        %s367 = smul.u32 16, %s23
        %p368 = scmp.eq.s32.totalorder %s24, 0
        // Predicated region
        $region71: #{lgcn_encoder_forward.5} parent=65 // pred_check
          %p369 = pneg %p368
        $region72: #{lgcn_encoder_forward.5} parent=65 // pred_check_branch
          %371 = sbr.rel (%p369) target = $region74
        $region73: #{lgcn_encoder_forward.5} parent=65 // pred_region
          %372 = vst [vmem:[#allocation2] sm:$0xff] 0.0
          %373 = vst [vmem:[#allocation2 + $0x8] sm:$0xff] 0.0
          %374 = vst [vmem:[#allocation2 + $0x10] sm:$0xff] 0.0
          %375 = vst [vmem:[#allocation2 + $0x18] sm:$0xff] 0.0
          %376 = vst [vmem:[#allocation2 + $0x20] sm:$0xff] 0.0
          %377 = vst [vmem:[#allocation2 + $0x28] sm:$0xff] 0.0
          %378 = vst [vmem:[#allocation2 + $0x30] sm:$0xff] 0.0
          %379 = vst [vmem:[#allocation2 + $0x38] sm:$0xff] 0.0
          %380 = vst [vmem:[#allocation2 + $0x40] sm:$0xff] 0.0
          %381 = vst [vmem:[#allocation2 + $0x48] sm:$0xff] 0.0
          %382 = vst [vmem:[#allocation2 + $0x50] sm:$0xff] 0.0
          %383 = vst [vmem:[#allocation2 + $0x58] sm:$0xff] 0.0
          %384 = vst [vmem:[#allocation2 + $0x60] sm:$0xff] 0.0
          %385 = vst [vmem:[#allocation2 + $0x68] sm:$0xff] 0.0
          %386 = vst [vmem:[#allocation2 + $0x70] sm:$0xff] 0.0
          %387 = vst [vmem:[#allocation2 + $0x78] sm:$0xff] 0.0
        $region74: #{lgcn_encoder_forward.5} parent=65 // pred_fallthru
          _
        %v388 = vld [vmem:[#allocation2] sm:$0xff]
        %v389 = vld [vmem:[#allocation2 + $0x8] sm:$0xff]
        %v390 = vld [vmem:[#allocation2 + $0x10] sm:$0xff]
        %v391 = vld [vmem:[#allocation2 + $0x18] sm:$0xff]
        %v392 = vld [vmem:[#allocation2 + $0x20] sm:$0xff]
        %v393 = vld [vmem:[#allocation2 + $0x28] sm:$0xff]
        %v394 = vld [vmem:[#allocation2 + $0x30] sm:$0xff]
        %v395 = vld [vmem:[#allocation2 + $0x38] sm:$0xff]
        %v396 = vld [vmem:[#allocation2 + $0x40] sm:$0xff]
        %v397 = vld [vmem:[#allocation2 + $0x48] sm:$0xff]
        %v398 = vld [vmem:[#allocation2 + $0x50] sm:$0xff]
        %v399 = vld [vmem:[#allocation2 + $0x58] sm:$0xff]
        %v400 = vld [vmem:[#allocation2 + $0x60] sm:$0xff]
        %v401 = vld [vmem:[#allocation2 + $0x68] sm:$0xff]
        %v402 = vld [vmem:[#allocation2 + $0x70] sm:$0xff]
        %v403 = vld [vmem:[#allocation2 + $0x78] sm:$0xff]
        %v404 = vld [vmem:[%s310] sm:$0xff]
        %v405 = vld [vmem:[%s310 + $0x8] sm:$0xff]
        %v406 = vld [vmem:[%s310 + $0x10] sm:$0xff]
        %v407 = vld [vmem:[%s310 + $0x18] sm:$0xff]
        %v408 = vld [vmem:[%s310 + $0x20] sm:$0xff]
        %v409 = vld [vmem:[%s310 + $0x28] sm:$0xff]
        %v410 = vld [vmem:[%s310 + $0x30] sm:$0xff]
        %v411 = vld [vmem:[%s310 + $0x38] sm:$0xff]
        %v412 = vld [vmem:[%s310 + $0x40] sm:$0xff]
        %v413 = vld [vmem:[%s310 + $0x48] sm:$0xff]
        %v414 = vld [vmem:[%s310 + $0x50] sm:$0xff]
        %v415 = vld [vmem:[%s310 + $0x58] sm:$0xff]
        %v416 = vld [vmem:[%s310 + $0x60] sm:$0xff]
        %v417 = vld [vmem:[%s310 + $0x68] sm:$0xff]
        %v418 = vld [vmem:[%s310 + $0x70] sm:$0xff]
        %v419 = vld [vmem:[%s310 + $0x78] sm:$0xff]
        %v420 = vld [vmem:[%s353] sm:$0xff]
        %v421 = vld [vmem:[%s353 + $0x8] sm:$0xff]
        %v422 = vld [vmem:[%s353 + $0x10] sm:$0xff]
        %v423 = vld [vmem:[%s353 + $0x18] sm:$0xff]
        %v424 = vld [vmem:[%s353 + $0x20] sm:$0xff]
        %v425 = vld [vmem:[%s353 + $0x28] sm:$0xff]
        %v426 = vld [vmem:[%s353 + $0x30] sm:$0xff]
        %v427 = vld [vmem:[%s353 + $0x38] sm:$0xff]
        %v428 = vld [vmem:[%s353 + $0x40] sm:$0xff]
        %v429 = vld [vmem:[%s353 + $0x48] sm:$0xff]
        %v430 = vld [vmem:[%s353 + $0x50] sm:$0xff]
        %v431 = vld [vmem:[%s353 + $0x58] sm:$0xff]
        %v432 = vld [vmem:[%s353 + $0x60] sm:$0xff]
        %v433 = vld [vmem:[%s353 + $0x68] sm:$0xff]
        %v434 = vld [vmem:[%s353 + $0x70] sm:$0xff]
        %v435 = vld [vmem:[%s353 + $0x78] sm:$0xff]
        %436 = vmatprep.subr.mxu0 0.0
        %437 = vmatpush1.msra.mxu0 %v435
        %438 = vmatprep.subr.mxu0 0.0
        %439 = vmatpush1.msra.mxu0 %v434
        %440 = vmatprep.subr.mxu0 0.0
        %441 = vmatpush1.msra.mxu0 %v433
        %442 = vmatprep.subr.mxu0 0.0
        %443 = vmatpush1.msra.mxu0 %v432
        %444 = vmatprep.subr.mxu0 0.0
        %445 = vmatpush1.msra.mxu0 %v431
        %446 = vmatprep.subr.mxu0 0.0
        %447 = vmatpush1.msra.mxu0 %v430
        %448 = vmatprep.subr.mxu0 0.0
        %449 = vmatpush1.msra.mxu0 %v429
        %450 = vmatprep.subr.mxu0 0.0
        %451 = vmatpush1.msra.mxu0 %v428
        %452 = vmatprep.subr.mxu0 0.0
        %453 = vmatpush1.msra.mxu0 %v427
        %454 = vmatprep.subr.mxu0 0.0
        %455 = vmatpush1.msra.mxu0 %v426
        %456 = vmatprep.subr.mxu0 0.0
        %457 = vmatpush1.msra.mxu0 %v425
        %458 = vmatprep.subr.mxu0 0.0
        %459 = vmatpush1.msra.mxu0 %v424
        %460 = vmatprep.subr.mxu0 0.0
        %461 = vmatpush1.msra.mxu0 %v423
        %462 = vmatprep.subr.mxu0 0.0
        %463 = vmatpush1.msra.mxu0 %v422
        %464 = vmatprep.subr.mxu0 0.0
        %465 = vmatpush1.msra.mxu0 %v421
        %466 = vmatprep.subr.mxu0 0.0
        %467 = vmatpush1.msra.mxu0 %v420
        %468 = vmatprep.subr.mxu0 0.0
        %469 = vmatpush2.msra.mxu0 0.0
        %470 = vmatprep.subr.mxu0 0.0
        %471 = vmatpush2.msra.mxu0 0.0
        %472 = vmatprep.subr.mxu0 0.0
        %473 = vmatpush2.msra.mxu0 0.0
        %474 = vmatprep.subr.mxu0 0.0
        %475 = vmatpush2.msra.mxu0 0.0
        %476 = vmatprep.subr.mxu0 0.0
        %477 = vmatpush2.msra.mxu0 0.0
        %478 = vmatprep.subr.mxu0 0.0
        %479 = vmatpush2.msra.mxu0 0.0
        %480 = vmatprep.subr.mxu0 0.0
        %481 = vmatpush2.msra.mxu0 0.0
        %482 = vmatprep.subr.mxu0 0.0
        %483 = vmatpush2.msra.mxu0 0.0
        %484 = vmatprep.subr.mxu0 0.0
        %485 = vmatpush2.msra.mxu0 0.0
        %486 = vmatprep.subr.mxu0 0.0
        %487 = vmatpush2.msra.mxu0 0.0
        %488 = vmatprep.subr.mxu0 0.0
        %489 = vmatpush2.msra.mxu0 0.0
        %490 = vmatprep.subr.mxu0 0.0
        %491 = vmatpush2.msra.mxu0 0.0
        %492 = vmatprep.subr.mxu0 0.0
        %493 = vmatpush2.msra.mxu0 0.0
        %494 = vmatprep.subr.mxu0 0.0
        %495 = vmatpush2.msra.mxu0 0.0
        %496 = vmatprep.subr.mxu0 0.0
        %497 = vmatpush2.msra.mxu0 0.0
        %498 = vmatprep.subr.mxu0 0.0
        %499 = vmatpush2.msra.mxu0 0.0
        %500 = vmatprep.mubr.f32.mxu0 0.0
        %501 = vmatmul.mubr.f32.gmra.mxu0 %v404
        %v502 = vpop.f32.mrf.mxu0
        %v503 = vadd.f32 0.0, %v502
        %v504 = vpop.f32.mrf.mxu0
        %505 = vmatprep.mubr.f32.mxu0 0.0
        %506 = vmatmul.mubr.f32.gmra.mxu0 %v405
        %v507 = vpop.f32.mrf.mxu0
        %v508 = vadd.f32 0.0, %v507
        %v509 = vpop.f32.mrf.mxu0
        %510 = vmatprep.mubr.f32.mxu0 0.0
        %511 = vmatmul.mubr.f32.gmra.mxu0 %v406
        %v512 = vpop.f32.mrf.mxu0
        %v513 = vadd.f32 0.0, %v512
        %v514 = vpop.f32.mrf.mxu0
        %515 = vmatprep.mubr.f32.mxu0 0.0
        %516 = vmatmul.mubr.f32.gmra.mxu0 %v407
        %v517 = vpop.f32.mrf.mxu0
        %v518 = vadd.f32 0.0, %v517
        %v519 = vpop.f32.mrf.mxu0
        %520 = vmatprep.mubr.f32.mxu0 0.0
        %521 = vmatmul.mubr.f32.gmra.mxu0 %v408
        %v522 = vpop.f32.mrf.mxu0
        %v523 = vadd.f32 0.0, %v522
        %v524 = vpop.f32.mrf.mxu0
        %525 = vmatprep.mubr.f32.mxu0 0.0
        %526 = vmatmul.mubr.f32.gmra.mxu0 %v409
        %v527 = vpop.f32.mrf.mxu0
        %v528 = vadd.f32 0.0, %v527
        %v529 = vpop.f32.mrf.mxu0
        %530 = vmatprep.mubr.f32.mxu0 0.0
        %531 = vmatmul.mubr.f32.gmra.mxu0 %v410
        %v532 = vpop.f32.mrf.mxu0
        %v533 = vadd.f32 0.0, %v532
        %v534 = vpop.f32.mrf.mxu0
        %535 = vmatprep.mubr.f32.mxu0 0.0
        %536 = vmatmul.mubr.f32.gmra.mxu0 %v411
        %v537 = vpop.f32.mrf.mxu0
        %v538 = vadd.f32 0.0, %v537
        %v539 = vpop.f32.mrf.mxu0
        %540 = vmatprep.mubr.f32.mxu0 0.0
        %541 = vmatmul.mubr.f32.gmra.mxu0 %v412
        %v542 = vpop.f32.mrf.mxu0
        %v543 = vadd.f32 0.0, %v542
        %v544 = vpop.f32.mrf.mxu0
        %545 = vmatprep.mubr.f32.mxu0 0.0
        %546 = vmatmul.mubr.f32.gmra.mxu0 %v413
        %v547 = vpop.f32.mrf.mxu0
        %v548 = vadd.f32 0.0, %v547
        %v549 = vpop.f32.mrf.mxu0
        %550 = vmatprep.mubr.f32.mxu0 0.0
        %551 = vmatmul.mubr.f32.gmra.mxu0 %v414
        %v552 = vpop.f32.mrf.mxu0
        %v553 = vadd.f32 0.0, %v552
        %v554 = vpop.f32.mrf.mxu0
        %555 = vmatprep.mubr.f32.mxu0 0.0
        %556 = vmatmul.mubr.f32.gmra.mxu0 %v415
        %v557 = vpop.f32.mrf.mxu0
        %v558 = vadd.f32 0.0, %v557
        %v559 = vpop.f32.mrf.mxu0
        %560 = vmatprep.mubr.f32.mxu0 0.0
        %561 = vmatmul.mubr.f32.gmra.mxu0 %v416
        %v562 = vpop.f32.mrf.mxu0
        %v563 = vadd.f32 0.0, %v562
        %v564 = vpop.f32.mrf.mxu0
        %565 = vmatprep.mubr.f32.mxu0 0.0
        %566 = vmatmul.mubr.f32.gmra.mxu0 %v417
        %v567 = vpop.f32.mrf.mxu0
        %v568 = vadd.f32 0.0, %v567
        %v569 = vpop.f32.mrf.mxu0
        %570 = vmatprep.mubr.f32.mxu0 0.0
        %571 = vmatmul.mubr.f32.gmra.mxu0 %v418
        %v572 = vpop.f32.mrf.mxu0
        %v573 = vadd.f32 0.0, %v572
        %v574 = vpop.f32.mrf.mxu0
        %575 = vmatprep.mubr.f32.mxu0 0.0
        %576 = vmatmul.mubr.f32.gmra.mxu0 %v419
        %v577 = vpop.f32.mrf.mxu0
        %v578 = vadd.f32 0.0, %v577
        %v579 = vpop.f32.mrf.mxu0
        %580 = vdwg.mxu0
        %v581 = vadd.f32 %v388, %v503
        %v582 = vadd.f32 %v389, %v508
        %v583 = vadd.f32 %v390, %v513
        %v584 = vadd.f32 %v391, %v518
        %v585 = vadd.f32 %v392, %v523
        %v586 = vadd.f32 %v393, %v528
        %v587 = vadd.f32 %v394, %v533
        %v588 = vadd.f32 %v395, %v538
        %v589 = vadd.f32 %v396, %v543
        %v590 = vadd.f32 %v397, %v548
        %v591 = vadd.f32 %v398, %v553
        %v592 = vadd.f32 %v399, %v558
        %v593 = vadd.f32 %v400, %v563
        %v594 = vadd.f32 %v401, %v568
        %v595 = vadd.f32 %v402, %v573
        %v596 = vadd.f32 %v403, %v578
        %597 = vst [vmem:[#allocation2] sm:$0xff] %v581
        %598 = vst [vmem:[#allocation2 + $0x8] sm:$0xff] %v582
        %599 = vst [vmem:[#allocation2 + $0x10] sm:$0xff] %v583
        %600 = vst [vmem:[#allocation2 + $0x18] sm:$0xff] %v584
        %601 = vst [vmem:[#allocation2 + $0x20] sm:$0xff] %v585
        %602 = vst [vmem:[#allocation2 + $0x28] sm:$0xff] %v586
        %603 = vst [vmem:[#allocation2 + $0x30] sm:$0xff] %v587
        %604 = vst [vmem:[#allocation2 + $0x38] sm:$0xff] %v588
        %605 = vst [vmem:[#allocation2 + $0x40] sm:$0xff] %v589
        %606 = vst [vmem:[#allocation2 + $0x48] sm:$0xff] %v590
        %607 = vst [vmem:[#allocation2 + $0x50] sm:$0xff] %v591
        %608 = vst [vmem:[#allocation2 + $0x58] sm:$0xff] %v592
        %609 = vst [vmem:[#allocation2 + $0x60] sm:$0xff] %v593
        %610 = vst [vmem:[#allocation2 + $0x68] sm:$0xff] %v594
        %611 = vst [vmem:[#allocation2 + $0x70] sm:$0xff] %v595
        %612 = vst [vmem:[#allocation2 + $0x78] sm:$0xff] %v596
        %p613 = scmp.eq.s32.totalorder %s24, 3
        // Predicated region
        $region75: #{lgcn_encoder_forward.5} parent=65 // pred_check
          %p614 = pneg %p613
        $region76: #{lgcn_encoder_forward.5} parent=65 // pred_check_branch
          %616 = sbr.rel (%p614) target = $region78
        $region77: #{lgcn_encoder_forward.5} parent=65 // pred_region
          %v617 = vld [vmem:[#allocation2] sm:$0xff]
          %v618 = vld [vmem:[#allocation2 + $0x8] sm:$0xff]
          %v619 = vld [vmem:[#allocation2 + $0x10] sm:$0xff]
          %v620 = vld [vmem:[#allocation2 + $0x18] sm:$0xff]
          %v621 = vld [vmem:[#allocation2 + $0x20] sm:$0xff]
          %v622 = vld [vmem:[#allocation2 + $0x28] sm:$0xff]
          %v623 = vld [vmem:[#allocation2 + $0x30] sm:$0xff]
          %v624 = vld [vmem:[#allocation2 + $0x38] sm:$0xff]
          %v625 = vld [vmem:[#allocation2 + $0x40] sm:$0xff]
          %v626 = vld [vmem:[#allocation2 + $0x48] sm:$0xff]
          %v627 = vld [vmem:[#allocation2 + $0x50] sm:$0xff]
          %v628 = vld [vmem:[#allocation2 + $0x58] sm:$0xff]
          %v629 = vld [vmem:[#allocation2 + $0x60] sm:$0xff]
          %v630 = vld [vmem:[#allocation2 + $0x68] sm:$0xff]
          %v631 = vld [vmem:[#allocation2 + $0x70] sm:$0xff]
          %v632 = vld [vmem:[#allocation2 + $0x78] sm:$0xff]
          %633 = vst [vmem:[%s340] sm:$0xff] %v617
          %634 = vst [vmem:[%s340 + $0x8] sm:$0xff] %v618
          %635 = vst [vmem:[%s340 + $0x10] sm:$0xff] %v619
          %636 = vst [vmem:[%s340 + $0x18] sm:$0xff] %v620
          %637 = vst [vmem:[%s340 + $0x20] sm:$0xff] %v621
          %638 = vst [vmem:[%s340 + $0x28] sm:$0xff] %v622
          %639 = vst [vmem:[%s340 + $0x30] sm:$0xff] %v623
          %640 = vst [vmem:[%s340 + $0x38] sm:$0xff] %v624
          %641 = vst [vmem:[%s340 + $0x40] sm:$0xff] %v625
          %642 = vst [vmem:[%s340 + $0x48] sm:$0xff] %v626
          %643 = vst [vmem:[%s340 + $0x50] sm:$0xff] %v627
          %644 = vst [vmem:[%s340 + $0x58] sm:$0xff] %v628
          %645 = vst [vmem:[%s340 + $0x60] sm:$0xff] %v629
          %646 = vst [vmem:[%s340 + $0x68] sm:$0xff] %v630
          %647 = vst [vmem:[%s340 + $0x70] sm:$0xff] %v631
          %648 = vst [vmem:[%s340 + $0x78] sm:$0xff] %v632
          %v649 = vld [vmem:[%s359] sm:$0xff]
          %v650 = vld [vmem:[%s359 + $0x8] sm:$0xff]
          %v651 = vld [vmem:[%s359 + $0x10] sm:$0xff]
          %v652 = vld [vmem:[%s359 + $0x18] sm:$0xff]
          %v653 = vld [vmem:[%s359 + $0x20] sm:$0xff]
          %v654 = vld [vmem:[%s359 + $0x28] sm:$0xff]
          %v655 = vld [vmem:[%s359 + $0x30] sm:$0xff]
          %v656 = vld [vmem:[%s359 + $0x38] sm:$0xff]
          %v657 = vld [vmem:[%s359 + $0x40] sm:$0xff]
          %v658 = vld [vmem:[%s359 + $0x48] sm:$0xff]
          %v659 = vld [vmem:[%s359 + $0x50] sm:$0xff]
          %v660 = vld [vmem:[%s359 + $0x58] sm:$0xff]
          %v661 = vld [vmem:[%s359 + $0x60] sm:$0xff]
          %v662 = vld [vmem:[%s359 + $0x68] sm:$0xff]
          %v663 = vld [vmem:[%s359 + $0x70] sm:$0xff]
          %v664 = vld [vmem:[%s359 + $0x78] sm:$0xff]
          %v665 = vld [vmem:[#allocation2] sm:$0xff]
          %v666 = vld [vmem:[#allocation2 + $0x8] sm:$0xff]
          %v667 = vld [vmem:[#allocation2 + $0x10] sm:$0xff]
          %v668 = vld [vmem:[#allocation2 + $0x18] sm:$0xff]
          %v669 = vld [vmem:[#allocation2 + $0x20] sm:$0xff]
          %v670 = vld [vmem:[#allocation2 + $0x28] sm:$0xff]
          %v671 = vld [vmem:[#allocation2 + $0x30] sm:$0xff]
          %v672 = vld [vmem:[#allocation2 + $0x38] sm:$0xff]
          %v673 = vld [vmem:[#allocation2 + $0x40] sm:$0xff]
          %v674 = vld [vmem:[#allocation2 + $0x48] sm:$0xff]
          %v675 = vld [vmem:[#allocation2 + $0x50] sm:$0xff]
          %v676 = vld [vmem:[#allocation2 + $0x58] sm:$0xff]
          %v677 = vld [vmem:[#allocation2 + $0x60] sm:$0xff]
          %v678 = vld [vmem:[#allocation2 + $0x68] sm:$0xff]
          %v679 = vld [vmem:[#allocation2 + $0x70] sm:$0xff]
          %v680 = vld [vmem:[#allocation2 + $0x78] sm:$0xff]
          %v681 = vadd.f32 %v649, %v665
          %v682 = vadd.f32 %v650, %v666
          %v683 = vadd.f32 %v651, %v667
          %v684 = vadd.f32 %v652, %v668
          %v685 = vadd.f32 %v653, %v669
          %v686 = vadd.f32 %v654, %v670
          %v687 = vadd.f32 %v655, %v671
          %v688 = vadd.f32 %v656, %v672
          %v689 = vadd.f32 %v657, %v673
          %v690 = vadd.f32 %v658, %v674
          %v691 = vadd.f32 %v659, %v675
          %v692 = vadd.f32 %v660, %v676
          %v693 = vadd.f32 %v661, %v677
          %v694 = vadd.f32 %v662, %v678
          %v695 = vadd.f32 %v663, %v679
          %v696 = vadd.f32 %v664, %v680
          %697 = vst [vmem:[%s366] sm:$0xff] %v681
          %698 = vst [vmem:[%s366 + $0x8] sm:$0xff] %v682
          %699 = vst [vmem:[%s366 + $0x10] sm:$0xff] %v683
          %700 = vst [vmem:[%s366 + $0x18] sm:$0xff] %v684
          %701 = vst [vmem:[%s366 + $0x20] sm:$0xff] %v685
          %702 = vst [vmem:[%s366 + $0x28] sm:$0xff] %v686
          %703 = vst [vmem:[%s366 + $0x30] sm:$0xff] %v687
          %704 = vst [vmem:[%s366 + $0x38] sm:$0xff] %v688
          %705 = vst [vmem:[%s366 + $0x40] sm:$0xff] %v689
          %706 = vst [vmem:[%s366 + $0x48] sm:$0xff] %v690
          %707 = vst [vmem:[%s366 + $0x50] sm:$0xff] %v691
          %708 = vst [vmem:[%s366 + $0x58] sm:$0xff] %v692
          %709 = vst [vmem:[%s366 + $0x60] sm:$0xff] %v693
          %710 = vst [vmem:[%s366 + $0x68] sm:$0xff] %v694
          %711 = vst [vmem:[%s366 + $0x70] sm:$0xff] %v695
          %712 = vst [vmem:[%s366 + $0x78] sm:$0xff] %v696
        $region78: #{lgcn_encoder_forward.5} parent=65 // pred_fallthru
          _
        %s713 = sand.u32 %s119, 1
        %s714 = scalar_lea.sflag [#allocation5], %s713
        %s715 = sand.u32 %s119, 1
        %s716 = smul.addr %s715, 128
        %s717 = scalar_lea.vmem [#allocation4], %s716
        %s718 = smul.u32 16, %s23
        %p719 = scmp.lt.s32.totalorder %s718, 63
        %s720 = scalar_select %p719, %s718, 63
        %s721 = smul.addr %s720, 8
        %s722 = scalar_lea.vmem %s4, %s721
        // Predicated region
        $region79: #{lgcn_encoder_forward.5} parent=65 // pred_check
          %p723 = pneg %p129
        $region80: #{lgcn_encoder_forward.5} parent=65 // pred_check_branch
          %725 = sbr.rel (%p723) target = $region82
        $region81: #{lgcn_encoder_forward.5} parent=65 // pred_region
          %s726 = smul.u32 16, %s23
          %s728 = ssub.s32 2048, 2048
          %729 = vsyncadd %s714, %s728
          %s730 = smul.addr %s726, 128
          %s731 = scalar_lea.hbm %s3, %s730
          %s732 = sshll.u32 %s717, 4
          %s733 = int_to_ptr.vmem [resolvable:$true] %s732
          %738 = dma.vmem_to_hbm [thread:$0]  %s733, 2048, %s731, %s714, 128, 128, 8
        $region82: #{lgcn_encoder_forward.5} parent=65 // pred_fallthru
          _
        // Predicated region
        $region83: #{lgcn_encoder_forward.5} parent=65 // pred_check
          %p739 = pneg %p155
        $region84: #{lgcn_encoder_forward.5} parent=65 // pred_check_branch
          %741 = sbr.rel (%p739) target = $region86
        $region85: #{lgcn_encoder_forward.5} parent=65 // pred_region
          %s742 = smul.u32 16, %s23
        $region86: #{lgcn_encoder_forward.5} parent=65 // pred_fallthru
          _
      $region66: #{lgcn_encoder_forward.5} parent=5 // pred_fallthru
        _
      %p743 = scmp.le.s32.totalorder 2, %s14
      // Predicated region
      $region87: #{lgcn_encoder_forward.5} parent=5 // pred_check
        %p744 = pneg %p743
      $region88: #{lgcn_encoder_forward.5} parent=5 // pred_check_branch
        %746 = sbr.rel (%p744) target = $region90
      $region89: #{lgcn_encoder_forward.5} parent=5 // pred_region
        %s747 = ssub.s32 %s14, 2
        // Predicated region
        $region91: #{lgcn_encoder_forward.5} parent=89 // pred_check
          %p748 = pneg %p135
        $region92: #{lgcn_encoder_forward.5} parent=89 // pred_check_branch
          %750 = sbr.rel (%p748) target = $region94
        $region93: #{lgcn_encoder_forward.5} parent=89 // pred_region
          %s751 = sand.u32 %s120, 1
          %s752 = scalar_lea.sflag [#allocation5], %s751
          %s753 = sand.u32 %s120, 1
          %s754 = smul.addr %s753, 128
          %s755 = scalar_lea.vmem [#allocation4], %s754
          %756 = dma.done %s752, 2048
        $region94: #{lgcn_encoder_forward.5} parent=89 // pred_fallthru
          _
        // Predicated region
        $region95: #{lgcn_encoder_forward.5} parent=89 // pred_check
          %p757 = pneg %p161
        $region96: #{lgcn_encoder_forward.5} parent=89 // pred_check_branch
          %759 = sbr.rel (%p757) target = $region98
        $region97: #{lgcn_encoder_forward.5} parent=89 // pred_region
          %s760 = smul.u32 16, %s25
          %p761 = scmp.lt.s32.totalorder %s760, 63
          %s762 = scalar_select %p761, %s760, 63
          %s763 = smul.addr %s762, 8
          %s764 = scalar_lea.vmem %s4, %s763
        $region98: #{lgcn_encoder_forward.5} parent=89 // pred_fallthru
          _
      $region90: #{lgcn_encoder_forward.5} parent=5 // pred_fallthru
        _
    $region6: #{lgcn_encoder_forward.5} parent=1 // loop_footer
      %s18 = sadd.s32 1, %s14
    $region7: #{lgcn_encoder_forward.5} parent=1 // loop_footer_branch
      %13 = sbr.rel target = $region3
    $region8: #{lgcn_encoder_forward.5} parent=1 // loop_exit
      _
    %765 = vsyncpa [#allocation5], 1
    %s766 = scalar_lea.sflag [#allocation5], 1
    %767 = vsyncpa %s766, 1

</llo_original>
